<compile_context>
chip_gen: v7x
topology: tpu7x:2x2x1
jax: 0.10.0
libtpu: 0.0.40
codegen_flags: <defaults>
</compile_context>

<pallas_src>
import functools

import jax
import jax.numpy as jnp
import numpy as np
from jax.experimental import pallas as pl
from jax.experimental.pallas import tpu as pltpu


def _make_kernel(B, Cin, H, W, KH, KW, pad):
    """Builds the conv+scale kernel for a batch-block of B images."""
    Hp, Wp = H + 2 * pad, W + 2 * pad
    Ho, Wo = Hp - KH + 1, Wp - KW + 1
    LW = Ho * Wp                      # "wide" (row-stride Wp) output length

    def kernel(x_ref, w_ref, b_ref, s_ref, o_ref, xflat_ref, col_ref):
        # x_ref    : (B, Cin, H, W)        raw NCHW input block
        # w_ref    : (Cout, KH*KW*Cin)     weights, rows ordered (kh, kw, ci)
        # b_ref    : (Cout, 1)             bias (sublane vector)
        # s_ref    : (1, LW)               scaler laid out on the wide lane grid
        # o_ref    : (B, Cout, Ho*Wo)      lane-dense output block
        # xflat_ref: (Cin, FL)             flat zero-padded image, row stride Wp
        # col_ref  : (KH*KW*Cin, LW)       im2col matrix (MXU RHS)

        # Padding lanes are written exactly once; interior lanes are fully
        # overwritten for every image, so a single zero-fill suffices.
        xflat_ref[...] = jnp.zeros_like(xflat_ref)

        for b in range(B):                              # static, B <= 2
            xb = x_ref[b]                               # (Cin, H, W)
            # Scatter image rows into the flat padded buffer (row stride Wp).
            for r in range(H):
                off = (r + pad) * Wp + pad
                xflat_ref[:, off:off + W] = xb[:, r, :]

            # im2col: each (kh, kw) tap is a contiguous lane slice of the flat
            # image (no (H,W)->(H*W) relayouts).
            for kh in range(KH):
                for kw in range(KW):
                    t = kh * KW + kw
                    d = kh * Wp + kw
                    col_ref[t * Cin:(t + 1) * Cin, :] = xflat_ref[:, d:d + LW]

            # One MXU contraction, K = KH*KW*Cin, f32 accumulation.
            acc = jax.lax.dot_general(
                w_ref[...], col_ref[...],
                (((1,), (0,)), ((), ())),
                preferred_element_type=jnp.float32)     # (Cout, LW)

            # bias (per Cout row) then scaler (per W column, PyTorch broadcast).
            out_wide = (acc + b_ref[...]) * s_ref[...]

            # Compact the wide rows (stride Wp) into the dense Ho*Wo lane slab.
            for h in range(Ho):
                o_ref[b, :, h * Wo:(h + 1) * Wo] = (
                    out_wide[:, h * Wp:h * Wp + Wo].astype(o_ref.dtype))

    return kernel


@functools.lru_cache(maxsize=None)
def _tensorcores_per_chip() -> int:
    """v7x/v5p/v4 expose 2 TensorCores worth sharding over; v5e/v6e have 1."""
    try:
        kind = jax.devices()[0].device_kind.lower()
    except Exception:
        return 1
    return 2 if any(tag in kind for tag in ("v7", "v5p", "v4")) else 1


@functools.partial(jax.jit, static_argnames=("padding", "grid_n"))
def _scaling_conv_adapter_impl(x_nchw, w_oihw, bias, scaler, *, padding, grid_n):
    N, Cin, H, W = x_nchw.shape
    Cout, Cin_w, KH, KW = w_oihw.shape
    assert Cin == Cin_w
    Hp, Wp = H + 2 * padding, W + 2 * padding
    Ho, Wo = Hp - KH + 1, Wp - KW + 1
    # The PyTorch `x *= scaler` broadcast only type-checks when W_out == Cout.
    assert Wo == Cout, "PyTorch broadcast requires W_out == out_channels"
    assert N % grid_n == 0
    B = N // grid_n
    K = KH * KW * Cin
    LW = Ho * Wp
    # Flat padded-image length (lane-padded so every tap slice is in bounds).
    need = (KH - 1) * Wp + (KW - 1) + LW
    FL = ((need + 127) // 128) * 128

    # Layout-only parameter prep (tiny tensors; fused under this jit):
    #  - weights -> (Cout, K) with rows ordered (kh, kw, ci) to match im2col,
    #  - bias    -> (Cout, 1) sublane vector,
    #  - scaler  -> laid out on the wide lane grid so `out[..., w] *= scaler[w]`
    #               becomes a pure lane-wise multiply.
    w2 = jnp.transpose(w_oihw, (0, 2, 3, 1)).reshape(Cout, K)
    b2 = bias.reshape(Cout, 1).astype(jnp.float32)
    s2 = jnp.tile(jnp.pad(scaler, (0, Wp - Wo)), Ho).reshape(1, LW)
    s2 = s2.astype(jnp.float32)

    kernel = _make_kernel(B, Cin, H, W, KH, KW, padding)

    out_flat = pl.pallas_call(
        kernel,
        out_shape=jax.ShapeDtypeStruct((N, Cout, Ho * Wo), x_nchw.dtype),
        grid_spec=pltpu.PrefetchScalarGridSpec(
            num_scalar_prefetch=0,
            grid=(grid_n,),
            in_specs=[
                pl.BlockSpec((B, Cin, H, W), lambda i: (i, 0, 0, 0)),
                pl.BlockSpec((Cout, K), lambda i: (0, 0)),
                pl.BlockSpec((Cout, 1), lambda i: (0, 0)),
                pl.BlockSpec((1, LW), lambda i: (0, 0)),
            ],
            out_specs=pl.BlockSpec((B, Cout, Ho * Wo), lambda i: (i, 0, 0)),
            scratch_shapes=[
                pltpu.VMEM((Cin, FL), x_nchw.dtype),   # flat padded image
                pltpu.VMEM((K, LW), x_nchw.dtype),     # im2col matrix
            ],
        ),
        compiler_params=pltpu.CompilerParams(
            dimension_semantics=("parallel",) if grid_n > 1 else ("arbitrary",)),
    )(x_nchw, w2, b2, s2)

    # Free reshape back to PyTorch NCHW (N, Cout, Ho, Wo).
    return out_flat.reshape(N, Cout, Ho, Wo)


def scaling_conv_adapter(x_nchw, w_oihw, bias, scaler, *, padding=1):
    """conv2d(x) + bias, then `*= scaler` with PyTorch NCHW broadcast semantics."""
    N = x_nchw.shape[0]
    # Fold the whole batch into one grid step on single-TC chips (v5e/v6e);
    # keep a batch-parallel grid on multi-TC chips (v7x) so work shards.
    grid_n = N if (_tensorcores_per_chip() > 1 and N > 1) else 1
    return _scaling_conv_adapter_impl(
        x_nchw, w_oihw, bias, scaler, padding=padding, grid_n=grid_n)


def _reference(x_nchw, w_oihw, bias, scaler, *, padding=1):
    y = jax.lax.conv_general_dilated(
        x_nchw, w_oihw, window_strides=(1, 1),
        padding=[(padding, padding), (padding, padding)],
        dimension_numbers=("NCHW", "OIHW", "NCHW"))
    y = y + bias.reshape(1, -1, 1, 1)
    y = y * scaler  # broadcasts along last axis (W), same as torch
    return y


if __name__ == "__main__":
    # Conv2d(4 -> 16, kernel 3x3, stride 1, padding 1); W_out = 16 = Cout so
    # the PyTorch `x *= scaler` broadcast is well-formed.
    N, Cin, H, W = 2, 4, 16, 16
    Cout, KH, KW = 16, 3, 3

    key = jax.random.PRNGKey(0)
    kx, kw, kb, ks = jax.random.split(key, 4)
    x = jax.random.normal(kx, (N, Cin, H, W), jnp.float32)
    conv_w = jax.random.normal(kw, (Cout, Cin, KH, KW), jnp.float32) * 0.1
    conv_b = jax.random.normal(kb, (Cout,), jnp.float32) * 0.1
    # Module initializes scaler to ones, but it is a trainable parameter;
    # perturb it so the per-W broadcast is actually exercised.
    scaler = 1.0 + 0.1 * jax.random.normal(ks, (Cout,), jnp.float32)

    out = scaling_conv_adapter(x, conv_w, conv_b, scaler, padding=1)
    out = jax.block_until_ready(out)

    ref = _reference(x, conv_w, conv_b, scaler, padding=1)
    np.testing.assert_allclose(np.asarray(out), np.asarray(ref),
                               rtol=2e-4, atol=2e-4)
    print("KERNEL_OK")
</pallas_src>

<mosaic_0001>
module attributes {stable_mosaic.version = 11 : i64} {
  func.func @kernel(%arg0: i32, %arg1: memref<2x4x16x16xf32, #tpu.memory_space<vmem>>, %arg2: memref<16x36xf32, #tpu.memory_space<vmem>>, %arg3: memref<16x1xf32, #tpu.memory_space<vmem>>, %arg4: memref<1x288xf32, #tpu.memory_space<vmem>>, %arg5: memref<2x16x256xf32, #tpu.memory_space<vmem>>, %arg6: memref<4x384xf32, #tpu.memory_space<vmem>>, %arg7: memref<36x288xf32, #tpu.memory_space<vmem>>) attributes {dimension_semantics = [#tpu.dimension_semantics<arbitrary>], iteration_bounds = array<i64: 1>, scalar_prefetch = 0 : i64, scratch_operands = 2 : i64, tpu.core_type = #tpu.core_type<tc>, window_params = [{transform_indices = @transform_0, window_bounds = array<i64: 2, 4, 16, 16>}, {pipeline_mode = #tpu.pipeline_mode<synchronous>, transform_indices = @transform_1, window_bounds = array<i64: 16, 36>}, {pipeline_mode = #tpu.pipeline_mode<synchronous>, transform_indices = @transform_2, window_bounds = array<i64: 16, 1>}, {pipeline_mode = #tpu.pipeline_mode<synchronous>, transform_indices = @transform_3, window_bounds = array<i64: 1, 288>}, {transform_indices = @transform_4, window_bounds = array<i64: 2, 16, 256>}]} {
    %cst = arith.constant 0.000000e+00 : f32
    %0 = vector.broadcast %cst : f32 to vector<4x384xf32>
    %c0 = arith.constant 0 : index
    %c0_0 = arith.constant 0 : index
    %1 = vector.load %arg6[%c0, %c0_0] : memref<4x384xf32, #tpu.memory_space<vmem>>, vector<4x384xf32>
    tpu.vector_store %arg6[%c0, %c0_0], %0 {strides = array<i32>} : memref<4x384xf32, #tpu.memory_space<vmem>>, vector<4x384xf32>,
    %c0_1 = arith.constant 0 : index
    %c0_2 = arith.constant 0 : index
    %c0_3 = arith.constant 0 : index
    %c0_4 = arith.constant 0 : index
    %2 = vector.load %arg1[%c0_1, %c0_2, %c0_3, %c0_4] : memref<2x4x16x16xf32, #tpu.memory_space<vmem>>, vector<1x4x16x16xf32>
    %3 = vector.shape_cast %2 : vector<1x4x16x16xf32> to vector<4x16x16xf32>
    %4 = vector.extract_strided_slice %3 {offsets = [0, 0, 0], sizes = [4, 1, 16], strides = [1, 1, 1]} : vector<4x16x16xf32> to vector<4x1x16xf32>
    %5 = vector.shape_cast %4 : vector<4x1x16xf32> to vector<4x16xf32>
    %c0_5 = arith.constant 0 : index
    %c19 = arith.constant 19 : index
    %6 = vector.load %arg6[%c0_5, %c19] : memref<4x384xf32, #tpu.memory_space<vmem>>, vector<4x16xf32>
    tpu.vector_store %arg6[%c0_5, %c19], %5 {strides = array<i32>} : memref<4x384xf32, #tpu.memory_space<vmem>>, vector<4x16xf32>,
    %7 = vector.extract_strided_slice %3 {offsets = [0, 1, 0], sizes = [4, 1, 16], strides = [1, 1, 1]} : vector<4x16x16xf32> to vector<4x1x16xf32>
    %8 = vector.shape_cast %7 : vector<4x1x16xf32> to vector<4x16xf32>
    %c0_6 = arith.constant 0 : index
    %c37 = arith.constant 37 : index
    %9 = vector.load %arg6[%c0_6, %c37] : memref<4x384xf32, #tpu.memory_space<vmem>>, vector<4x16xf32>
    tpu.vector_store %arg6[%c0_6, %c37], %8 {strides = array<i32>} : memref<4x384xf32, #tpu.memory_space<vmem>>, vector<4x16xf32>,
    %10 = vector.extract_strided_slice %3 {offsets = [0, 2, 0], sizes = [4, 1, 16], strides = [1, 1, 1]} : vector<4x16x16xf32> to vector<4x1x16xf32>
    %11 = vector.shape_cast %10 : vector<4x1x16xf32> to vector<4x16xf32>
    %c0_7 = arith.constant 0 : index
    %c55 = arith.constant 55 : index
    %12 = vector.load %arg6[%c0_7, %c55] : memref<4x384xf32, #tpu.memory_space<vmem>>, vector<4x16xf32>
    tpu.vector_store %arg6[%c0_7, %c55], %11 {strides = array<i32>} : memref<4x384xf32, #tpu.memory_space<vmem>>, vector<4x16xf32>,
    %13 = vector.extract_strided_slice %3 {offsets = [0, 3, 0], sizes = [4, 1, 16], strides = [1, 1, 1]} : vector<4x16x16xf32> to vector<4x1x16xf32>
    %14 = vector.shape_cast %13 : vector<4x1x16xf32> to vector<4x16xf32>
    %c0_8 = arith.constant 0 : index
    %c73 = arith.constant 73 : index
    %15 = vector.load %arg6[%c0_8, %c73] : memref<4x384xf32, #tpu.memory_space<vmem>>, vector<4x16xf32>
    tpu.vector_store %arg6[%c0_8, %c73], %14 {strides = array<i32>} : memref<4x384xf32, #tpu.memory_space<vmem>>, vector<4x16xf32>,
    %16 = vector.extract_strided_slice %3 {offsets = [0, 4, 0], sizes = [4, 1, 16], strides = [1, 1, 1]} : vector<4x16x16xf32> to vector<4x1x16xf32>
    %17 = vector.shape_cast %16 : vector<4x1x16xf32> to vector<4x16xf32>
    %c0_9 = arith.constant 0 : index
    %c91 = arith.constant 91 : index
    %18 = vector.load %arg6[%c0_9, %c91] : memref<4x384xf32, #tpu.memory_space<vmem>>, vector<4x16xf32>
    tpu.vector_store %arg6[%c0_9, %c91], %17 {strides = array<i32>} : memref<4x384xf32, #tpu.memory_space<vmem>>, vector<4x16xf32>,
    %19 = vector.extract_strided_slice %3 {offsets = [0, 5, 0], sizes = [4, 1, 16], strides = [1, 1, 1]} : vector<4x16x16xf32> to vector<4x1x16xf32>
    %20 = vector.shape_cast %19 : vector<4x1x16xf32> to vector<4x16xf32>
    %c0_10 = arith.constant 0 : index
    %c109 = arith.constant 109 : index
    %21 = vector.load %arg6[%c0_10, %c109] : memref<4x384xf32, #tpu.memory_space<vmem>>, vector<4x16xf32>
    tpu.vector_store %arg6[%c0_10, %c109], %20 {strides = array<i32>} : memref<4x384xf32, #tpu.memory_space<vmem>>, vector<4x16xf32>,
    %22 = vector.extract_strided_slice %3 {offsets = [0, 6, 0], sizes = [4, 1, 16], strides = [1, 1, 1]} : vector<4x16x16xf32> to vector<4x1x16xf32>
    %23 = vector.shape_cast %22 : vector<4x1x16xf32> to vector<4x16xf32>
    %c0_11 = arith.constant 0 : index
    %c127 = arith.constant 127 : index
    %24 = vector.load %arg6[%c0_11, %c127] : memref<4x384xf32, #tpu.memory_space<vmem>>, vector<4x16xf32>
    tpu.vector_store %arg6[%c0_11, %c127], %23 {strides = array<i32>} : memref<4x384xf32, #tpu.memory_space<vmem>>, vector<4x16xf32>,
    %25 = vector.extract_strided_slice %3 {offsets = [0, 7, 0], sizes = [4, 1, 16], strides = [1, 1, 1]} : vector<4x16x16xf32> to vector<4x1x16xf32>
    %26 = vector.shape_cast %25 : vector<4x1x16xf32> to vector<4x16xf32>
    %c0_12 = arith.constant 0 : index
    %c145 = arith.constant 145 : index
    %27 = vector.load %arg6[%c0_12, %c145] : memref<4x384xf32, #tpu.memory_space<vmem>>, vector<4x16xf32>
    tpu.vector_store %arg6[%c0_12, %c145], %26 {strides = array<i32>} : memref<4x384xf32, #tpu.memory_space<vmem>>, vector<4x16xf32>,
    %28 = vector.extract_strided_slice %3 {offsets = [0, 8, 0], sizes = [4, 1, 16], strides = [1, 1, 1]} : vector<4x16x16xf32> to vector<4x1x16xf32>
    %29 = vector.shape_cast %28 : vector<4x1x16xf32> to vector<4x16xf32>
    %c0_13 = arith.constant 0 : index
    %c163 = arith.constant 163 : index
    %30 = vector.load %arg6[%c0_13, %c163] : memref<4x384xf32, #tpu.memory_space<vmem>>, vector<4x16xf32>
    tpu.vector_store %arg6[%c0_13, %c163], %29 {strides = array<i32>} : memref<4x384xf32, #tpu.memory_space<vmem>>, vector<4x16xf32>,
    %31 = vector.extract_strided_slice %3 {offsets = [0, 9, 0], sizes = [4, 1, 16], strides = [1, 1, 1]} : vector<4x16x16xf32> to vector<4x1x16xf32>
    %32 = vector.shape_cast %31 : vector<4x1x16xf32> to vector<4x16xf32>
    %c0_14 = arith.constant 0 : index
    %c181 = arith.constant 181 : index
    %33 = vector.load %arg6[%c0_14, %c181] : memref<4x384xf32, #tpu.memory_space<vmem>>, vector<4x16xf32>
    tpu.vector_store %arg6[%c0_14, %c181], %32 {strides = array<i32>} : memref<4x384xf32, #tpu.memory_space<vmem>>, vector<4x16xf32>,
    %34 = vector.extract_strided_slice %3 {offsets = [0, 10, 0], sizes = [4, 1, 16], strides = [1, 1, 1]} : vector<4x16x16xf32> to vector<4x1x16xf32>
    %35 = vector.shape_cast %34 : vector<4x1x16xf32> to vector<4x16xf32>
    %c0_15 = arith.constant 0 : index
    %c199 = arith.constant 199 : index
    %36 = vector.load %arg6[%c0_15, %c199] : memref<4x384xf32, #tpu.memory_space<vmem>>, vector<4x16xf32>
    tpu.vector_store %arg6[%c0_15, %c199], %35 {strides = array<i32>} : memref<4x384xf32, #tpu.memory_space<vmem>>, vector<4x16xf32>,
    %37 = vector.extract_strided_slice %3 {offsets = [0, 11, 0], sizes = [4, 1, 16], strides = [1, 1, 1]} : vector<4x16x16xf32> to vector<4x1x16xf32>
    %38 = vector.shape_cast %37 : vector<4x1x16xf32> to vector<4x16xf32>
    %c0_16 = arith.constant 0 : index
    %c217 = arith.constant 217 : index
    %39 = vector.load %arg6[%c0_16, %c217] : memref<4x384xf32, #tpu.memory_space<vmem>>, vector<4x16xf32>
    tpu.vector_store %arg6[%c0_16, %c217], %38 {strides = array<i32>} : memref<4x384xf32, #tpu.memory_space<vmem>>, vector<4x16xf32>,
    %40 = vector.extract_strided_slice %3 {offsets = [0, 12, 0], sizes = [4, 1, 16], strides = [1, 1, 1]} : vector<4x16x16xf32> to vector<4x1x16xf32>
    %41 = vector.shape_cast %40 : vector<4x1x16xf32> to vector<4x16xf32>
    %c0_17 = arith.constant 0 : index
    %c235 = arith.constant 235 : index
    %42 = vector.load %arg6[%c0_17, %c235] : memref<4x384xf32, #tpu.memory_space<vmem>>, vector<4x16xf32>
    tpu.vector_store %arg6[%c0_17, %c235], %41 {strides = array<i32>} : memref<4x384xf32, #tpu.memory_space<vmem>>, vector<4x16xf32>,
    %43 = vector.extract_strided_slice %3 {offsets = [0, 13, 0], sizes = [4, 1, 16], strides = [1, 1, 1]} : vector<4x16x16xf32> to vector<4x1x16xf32>
    %44 = vector.shape_cast %43 : vector<4x1x16xf32> to vector<4x16xf32>
    %c0_18 = arith.constant 0 : index
    %c253 = arith.constant 253 : index
    %45 = vector.load %arg6[%c0_18, %c253] : memref<4x384xf32, #tpu.memory_space<vmem>>, vector<4x16xf32>
    tpu.vector_store %arg6[%c0_18, %c253], %44 {strides = array<i32>} : memref<4x384xf32, #tpu.memory_space<vmem>>, vector<4x16xf32>,
    %46 = vector.extract_strided_slice %3 {offsets = [0, 14, 0], sizes = [4, 1, 16], strides = [1, 1, 1]} : vector<4x16x16xf32> to vector<4x1x16xf32>
    %47 = vector.shape_cast %46 : vector<4x1x16xf32> to vector<4x16xf32>
    %c0_19 = arith.constant 0 : index
    %c271 = arith.constant 271 : index
    %48 = vector.load %arg6[%c0_19, %c271] : memref<4x384xf32, #tpu.memory_space<vmem>>, vector<4x16xf32>
    tpu.vector_store %arg6[%c0_19, %c271], %47 {strides = array<i32>} : memref<4x384xf32, #tpu.memory_space<vmem>>, vector<4x16xf32>,
    %49 = vector.extract_strided_slice %3 {offsets = [0, 15, 0], sizes = [4, 1, 16], strides = [1, 1, 1]} : vector<4x16x16xf32> to vector<4x1x16xf32>
    %50 = vector.shape_cast %49 : vector<4x1x16xf32> to vector<4x16xf32>
    %c0_20 = arith.constant 0 : index
    %c289 = arith.constant 289 : index
    %51 = vector.load %arg6[%c0_20, %c289] : memref<4x384xf32, #tpu.memory_space<vmem>>, vector<4x16xf32>
    tpu.vector_store %arg6[%c0_20, %c289], %50 {strides = array<i32>} : memref<4x384xf32, #tpu.memory_space<vmem>>, vector<4x16xf32>,
    %c0_21 = arith.constant 0 : index
    %c0_22 = arith.constant 0 : index
    %52 = vector.load %arg6[%c0_21, %c0_22] : memref<4x384xf32, #tpu.memory_space<vmem>>, vector<4x288xf32>
    %c0_23 = arith.constant 0 : index
    %c0_24 = arith.constant 0 : index
    %53 = vector.load %arg7[%c0_23, %c0_24] : memref<36x288xf32, #tpu.memory_space<vmem>>, vector<4x288xf32>
    tpu.vector_store %arg7[%c0_23, %c0_24], %52 {strides = array<i32>} : memref<36x288xf32, #tpu.memory_space<vmem>>, vector<4x288xf32>,
    %c0_25 = arith.constant 0 : index
    %c1 = arith.constant 1 : index
    %54 = vector.load %arg6[%c0_25, %c1] : memref<4x384xf32, #tpu.memory_space<vmem>>, vector<4x288xf32>
    %c4 = arith.constant 4 : index
    %c0_26 = arith.constant 0 : index
    %55 = vector.load %arg7[%c4, %c0_26] : memref<36x288xf32, #tpu.memory_space<vmem>>, vector<4x288xf32>
    tpu.vector_store %arg7[%c4, %c0_26], %54 {strides = array<i32>} : memref<36x288xf32, #tpu.memory_space<vmem>>, vector<4x288xf32>,
    %c0_27 = arith.constant 0 : index
    %c2 = arith.constant 2 : index
    %56 = vector.load %arg6[%c0_27, %c2] : memref<4x384xf32, #tpu.memory_space<vmem>>, vector<4x288xf32>
    %c8 = arith.constant 8 : index
    %c0_28 = arith.constant 0 : index
    %57 = vector.load %arg7[%c8, %c0_28] : memref<36x288xf32, #tpu.memory_space<vmem>>, vector<4x288xf32>
    tpu.vector_store %arg7[%c8, %c0_28], %56 {strides = array<i32>} : memref<36x288xf32, #tpu.memory_space<vmem>>, vector<4x288xf32>,
    %c0_29 = arith.constant 0 : index
    %c18 = arith.constant 18 : index
    %58 = vector.load %arg6[%c0_29, %c18] : memref<4x384xf32, #tpu.memory_space<vmem>>, vector<4x288xf32>
    %c12 = arith.constant 12 : index
    %c0_30 = arith.constant 0 : index
    %59 = vector.load %arg7[%c12, %c0_30] : memref<36x288xf32, #tpu.memory_space<vmem>>, vector<4x288xf32>
    tpu.vector_store %arg7[%c12, %c0_30], %58 {strides = array<i32>} : memref<36x288xf32, #tpu.memory_space<vmem>>, vector<4x288xf32>,
    %c0_31 = arith.constant 0 : index
    %c19_32 = arith.constant 19 : index
    %60 = vector.load %arg6[%c0_31, %c19_32] : memref<4x384xf32, #tpu.memory_space<vmem>>, vector<4x288xf32>
    %c16 = arith.constant 16 : index
    %c0_33 = arith.constant 0 : index
    %61 = vector.load %arg7[%c16, %c0_33] : memref<36x288xf32, #tpu.memory_space<vmem>>, vector<4x288xf32>
    tpu.vector_store %arg7[%c16, %c0_33], %60 {strides = array<i32>} : memref<36x288xf32, #tpu.memory_space<vmem>>, vector<4x288xf32>,
    %c0_34 = arith.constant 0 : index
    %c20 = arith.constant 20 : index
    %62 = vector.load %arg6[%c0_34, %c20] : memref<4x384xf32, #tpu.memory_space<vmem>>, vector<4x288xf32>
    %c20_35 = arith.constant 20 : index
    %c0_36 = arith.constant 0 : index
    %63 = vector.load %arg7[%c20_35, %c0_36] : memref<36x288xf32, #tpu.memory_space<vmem>>, vector<4x288xf32>
    tpu.vector_store %arg7[%c20_35, %c0_36], %62 {strides = array<i32>} : memref<36x288xf32, #tpu.memory_space<vmem>>, vector<4x288xf32>,
    %c0_37 = arith.constant 0 : index
    %c36 = arith.constant 36 : index
    %64 = vector.load %arg6[%c0_37, %c36] : memref<4x384xf32, #tpu.memory_space<vmem>>, vector<4x288xf32>
    %c24 = arith.constant 24 : index
    %c0_38 = arith.constant 0 : index
    %65 = vector.load %arg7[%c24, %c0_38] : memref<36x288xf32, #tpu.memory_space<vmem>>, vector<4x288xf32>
    tpu.vector_store %arg7[%c24, %c0_38], %64 {strides = array<i32>} : memref<36x288xf32, #tpu.memory_space<vmem>>, vector<4x288xf32>,
    %c0_39 = arith.constant 0 : index
    %c37_40 = arith.constant 37 : index
    %66 = vector.load %arg6[%c0_39, %c37_40] : memref<4x384xf32, #tpu.memory_space<vmem>>, vector<4x288xf32>
    %c28 = arith.constant 28 : index
    %c0_41 = arith.constant 0 : index
    %67 = vector.load %arg7[%c28, %c0_41] : memref<36x288xf32, #tpu.memory_space<vmem>>, vector<4x288xf32>
    tpu.vector_store %arg7[%c28, %c0_41], %66 {strides = array<i32>} : memref<36x288xf32, #tpu.memory_space<vmem>>, vector<4x288xf32>,
    %c0_42 = arith.constant 0 : index
    %c38 = arith.constant 38 : index
    %68 = vector.load %arg6[%c0_42, %c38] : memref<4x384xf32, #tpu.memory_space<vmem>>, vector<4x288xf32>
    %c32 = arith.constant 32 : index
    %c0_43 = arith.constant 0 : index
    %69 = vector.load %arg7[%c32, %c0_43] : memref<36x288xf32, #tpu.memory_space<vmem>>, vector<4x288xf32>
    tpu.vector_store %arg7[%c32, %c0_43], %68 {strides = array<i32>} : memref<36x288xf32, #tpu.memory_space<vmem>>, vector<4x288xf32>,
    %c0_44 = arith.constant 0 : index
    %c0_45 = arith.constant 0 : index
    %70 = vector.load %arg2[%c0_44, %c0_45] : memref<16x36xf32, #tpu.memory_space<vmem>>, vector<16x36xf32>
    %c0_46 = arith.constant 0 : index
    %c0_47 = arith.constant 0 : index
    %71 = vector.load %arg7[%c0_46, %c0_47] : memref<36x288xf32, #tpu.memory_space<vmem>>, vector<36x288xf32>
    %cst_48 = arith.constant dense<0.000000e+00> : vector<16x288xf32>
    %72 = tpu.matmul %70, %71, %cst_48 {dimension_numbers = #tpu.dot_dimension_numbers<[1], [0], [0], [1], [0, 0, 1, 1], [], []>} : vector<16x36xf32>, vector<36x288xf32>, vector<16x288xf32> -> vector<16x288xf32>
    %c0_49 = arith.constant 0 : index
    %c0_50 = arith.constant 0 : index
    %73 = vector.load %arg3[%c0_49, %c0_50] : memref<16x1xf32, #tpu.memory_space<vmem>>, vector<16x1xf32>
    %74 = vector.broadcast %73 : vector<16x1xf32> to vector<16x288xf32>
    %75 = arith.addf %72, %74 : vector<16x288xf32>
    %c0_51 = arith.constant 0 : index
    %c0_52 = arith.constant 0 : index
    %76 = vector.load %arg4[%c0_51, %c0_52] : memref<1x288xf32, #tpu.memory_space<vmem>>, vector<1x288xf32>
    %77 = vector.broadcast %76 : vector<1x288xf32> to vector<16x288xf32>
    %78 = arith.mulf %75, %77 : vector<16x288xf32>
    %79 = vector.extract_strided_slice %78 {offsets = [0, 0], sizes = [16, 16], strides = [1, 1]} : vector<16x288xf32> to vector<16x16xf32>
    %c0_53 = arith.constant 0 : index
    %c0_54 = arith.constant 0 : index
    %c0_55 = arith.constant 0 : index
    %80 = vector.load %arg5[%c0_53, %c0_54, %c0_55] : memref<2x16x256xf32, #tpu.memory_space<vmem>>, vector<1x16x16xf32>
    %81 = vector.shape_cast %80 : vector<1x16x16xf32> to vector<16x16xf32>
    %82 = vector.shape_cast %79 : vector<16x16xf32> to vector<1x16x16xf32>
    tpu.vector_store %arg5[%c0_53, %c0_54, %c0_55], %82 {strides = array<i32>} : memref<2x16x256xf32, #tpu.memory_space<vmem>>, vector<1x16x16xf32>,
    %83 = vector.extract_strided_slice %78 {offsets = [0, 18], sizes = [16, 16], strides = [1, 1]} : vector<16x288xf32> to vector<16x16xf32>
    %c0_56 = arith.constant 0 : index
    %c0_57 = arith.constant 0 : index
    %c16_58 = arith.constant 16 : index
    %84 = vector.load %arg5[%c0_56, %c0_57, %c16_58] : memref<2x16x256xf32, #tpu.memory_space<vmem>>, vector<1x16x16xf32>
    %85 = vector.shape_cast %84 : vector<1x16x16xf32> to vector<16x16xf32>
    %86 = vector.shape_cast %83 : vector<16x16xf32> to vector<1x16x16xf32>
    tpu.vector_store %arg5[%c0_56, %c0_57, %c16_58], %86 {strides = array<i32>} : memref<2x16x256xf32, #tpu.memory_space<vmem>>, vector<1x16x16xf32>,
    %87 = vector.extract_strided_slice %78 {offsets = [0, 36], sizes = [16, 16], strides = [1, 1]} : vector<16x288xf32> to vector<16x16xf32>
    %c0_59 = arith.constant 0 : index
    %c0_60 = arith.constant 0 : index
    %c32_61 = arith.constant 32 : index
    %88 = vector.load %arg5[%c0_59, %c0_60, %c32_61] : memref<2x16x256xf32, #tpu.memory_space<vmem>>, vector<1x16x16xf32>
    %89 = vector.shape_cast %88 : vector<1x16x16xf32> to vector<16x16xf32>
    %90 = vector.shape_cast %87 : vector<16x16xf32> to vector<1x16x16xf32>
    tpu.vector_store %arg5[%c0_59, %c0_60, %c32_61], %90 {strides = array<i32>} : memref<2x16x256xf32, #tpu.memory_space<vmem>>, vector<1x16x16xf32>,
    %91 = vector.extract_strided_slice %78 {offsets = [0, 54], sizes = [16, 16], strides = [1, 1]} : vector<16x288xf32> to vector<16x16xf32>
    %c0_62 = arith.constant 0 : index
    %c0_63 = arith.constant 0 : index
    %c48 = arith.constant 48 : index
    %92 = vector.load %arg5[%c0_62, %c0_63, %c48] : memref<2x16x256xf32, #tpu.memory_space<vmem>>, vector<1x16x16xf32>
    %93 = vector.shape_cast %92 : vector<1x16x16xf32> to vector<16x16xf32>
    %94 = vector.shape_cast %91 : vector<16x16xf32> to vector<1x16x16xf32>
    tpu.vector_store %arg5[%c0_62, %c0_63, %c48], %94 {strides = array<i32>} : memref<2x16x256xf32, #tpu.memory_space<vmem>>, vector<1x16x16xf32>,
    %95 = vector.extract_strided_slice %78 {offsets = [0, 72], sizes = [16, 16], strides = [1, 1]} : vector<16x288xf32> to vector<16x16xf32>
    %c0_64 = arith.constant 0 : index
    %c0_65 = arith.constant 0 : index
    %c64 = arith.constant 64 : index
    %96 = vector.load %arg5[%c0_64, %c0_65, %c64] : memref<2x16x256xf32, #tpu.memory_space<vmem>>, vector<1x16x16xf32>
    %97 = vector.shape_cast %96 : vector<1x16x16xf32> to vector<16x16xf32>
    %98 = vector.shape_cast %95 : vector<16x16xf32> to vector<1x16x16xf32>
    tpu.vector_store %arg5[%c0_64, %c0_65, %c64], %98 {strides = array<i32>} : memref<2x16x256xf32, #tpu.memory_space<vmem>>, vector<1x16x16xf32>,
    %99 = vector.extract_strided_slice %78 {offsets = [0, 90], sizes = [16, 16], strides = [1, 1]} : vector<16x288xf32> to vector<16x16xf32>
    %c0_66 = arith.constant 0 : index
    %c0_67 = arith.constant 0 : index
    %c80 = arith.constant 80 : index
    %100 = vector.load %arg5[%c0_66, %c0_67, %c80] : memref<2x16x256xf32, #tpu.memory_space<vmem>>, vector<1x16x16xf32>
    %101 = vector.shape_cast %100 : vector<1x16x16xf32> to vector<16x16xf32>
    %102 = vector.shape_cast %99 : vector<16x16xf32> to vector<1x16x16xf32>
    tpu.vector_store %arg5[%c0_66, %c0_67, %c80], %102 {strides = array<i32>} : memref<2x16x256xf32, #tpu.memory_space<vmem>>, vector<1x16x16xf32>,
    %103 = vector.extract_strided_slice %78 {offsets = [0, 108], sizes = [16, 16], strides = [1, 1]} : vector<16x288xf32> to vector<16x16xf32>
    %c0_68 = arith.constant 0 : index
    %c0_69 = arith.constant 0 : index
    %c96 = arith.constant 96 : index
    %104 = vector.load %arg5[%c0_68, %c0_69, %c96] : memref<2x16x256xf32, #tpu.memory_space<vmem>>, vector<1x16x16xf32>
    %105 = vector.shape_cast %104 : vector<1x16x16xf32> to vector<16x16xf32>
    %106 = vector.shape_cast %103 : vector<16x16xf32> to vector<1x16x16xf32>
    tpu.vector_store %arg5[%c0_68, %c0_69, %c96], %106 {strides = array<i32>} : memref<2x16x256xf32, #tpu.memory_space<vmem>>, vector<1x16x16xf32>,
    %107 = vector.extract_strided_slice %78 {offsets = [0, 126], sizes = [16, 16], strides = [1, 1]} : vector<16x288xf32> to vector<16x16xf32>
    %c0_70 = arith.constant 0 : index
    %c0_71 = arith.constant 0 : index
    %c112 = arith.constant 112 : index
    %108 = vector.load %arg5[%c0_70, %c0_71, %c112] : memref<2x16x256xf32, #tpu.memory_space<vmem>>, vector<1x16x16xf32>
    %109 = vector.shape_cast %108 : vector<1x16x16xf32> to vector<16x16xf32>
    %110 = vector.shape_cast %107 : vector<16x16xf32> to vector<1x16x16xf32>
    tpu.vector_store %arg5[%c0_70, %c0_71, %c112], %110 {strides = array<i32>} : memref<2x16x256xf32, #tpu.memory_space<vmem>>, vector<1x16x16xf32>,
    %111 = vector.extract_strided_slice %78 {offsets = [0, 144], sizes = [16, 16], strides = [1, 1]} : vector<16x288xf32> to vector<16x16xf32>
    %c0_72 = arith.constant 0 : index
    %c0_73 = arith.constant 0 : index
    %c128 = arith.constant 128 : index
    %112 = vector.load %arg5[%c0_72, %c0_73, %c128] : memref<2x16x256xf32, #tpu.memory_space<vmem>>, vector<1x16x16xf32>
    %113 = vector.shape_cast %112 : vector<1x16x16xf32> to vector<16x16xf32>
    %114 = vector.shape_cast %111 : vector<16x16xf32> to vector<1x16x16xf32>
    tpu.vector_store %arg5[%c0_72, %c0_73, %c128], %114 {strides = array<i32>} : memref<2x16x256xf32, #tpu.memory_space<vmem>>, vector<1x16x16xf32>,
    %115 = vector.extract_strided_slice %78 {offsets = [0, 162], sizes = [16, 16], strides = [1, 1]} : vector<16x288xf32> to vector<16x16xf32>
    %c0_74 = arith.constant 0 : index
    %c0_75 = arith.constant 0 : index
    %c144 = arith.constant 144 : index
    %116 = vector.load %arg5[%c0_74, %c0_75, %c144] : memref<2x16x256xf32, #tpu.memory_space<vmem>>, vector<1x16x16xf32>
    %117 = vector.shape_cast %116 : vector<1x16x16xf32> to vector<16x16xf32>
    %118 = vector.shape_cast %115 : vector<16x16xf32> to vector<1x16x16xf32>
    tpu.vector_store %arg5[%c0_74, %c0_75, %c144], %118 {strides = array<i32>} : memref<2x16x256xf32, #tpu.memory_space<vmem>>, vector<1x16x16xf32>,
    %119 = vector.extract_strided_slice %78 {offsets = [0, 180], sizes = [16, 16], strides = [1, 1]} : vector<16x288xf32> to vector<16x16xf32>
    %c0_76 = arith.constant 0 : index
    %c0_77 = arith.constant 0 : index
    %c160 = arith.constant 160 : index
    %120 = vector.load %arg5[%c0_76, %c0_77, %c160] : memref<2x16x256xf32, #tpu.memory_space<vmem>>, vector<1x16x16xf32>
    %121 = vector.shape_cast %120 : vector<1x16x16xf32> to vector<16x16xf32>
    %122 = vector.shape_cast %119 : vector<16x16xf32> to vector<1x16x16xf32>
    tpu.vector_store %arg5[%c0_76, %c0_77, %c160], %122 {strides = array<i32>} : memref<2x16x256xf32, #tpu.memory_space<vmem>>, vector<1x16x16xf32>,
    %123 = vector.extract_strided_slice %78 {offsets = [0, 198], sizes = [16, 16], strides = [1, 1]} : vector<16x288xf32> to vector<16x16xf32>
    %c0_78 = arith.constant 0 : index
    %c0_79 = arith.constant 0 : index
    %c176 = arith.constant 176 : index
    %124 = vector.load %arg5[%c0_78, %c0_79, %c176] : memref<2x16x256xf32, #tpu.memory_space<vmem>>, vector<1x16x16xf32>
    %125 = vector.shape_cast %124 : vector<1x16x16xf32> to vector<16x16xf32>
    %126 = vector.shape_cast %123 : vector<16x16xf32> to vector<1x16x16xf32>
    tpu.vector_store %arg5[%c0_78, %c0_79, %c176], %126 {strides = array<i32>} : memref<2x16x256xf32, #tpu.memory_space<vmem>>, vector<1x16x16xf32>,
    %127 = vector.extract_strided_slice %78 {offsets = [0, 216], sizes = [16, 16], strides = [1, 1]} : vector<16x288xf32> to vector<16x16xf32>
    %c0_80 = arith.constant 0 : index
    %c0_81 = arith.constant 0 : index
    %c192 = arith.constant 192 : index
    %128 = vector.load %arg5[%c0_80, %c0_81, %c192] : memref<2x16x256xf32, #tpu.memory_space<vmem>>, vector<1x16x16xf32>
    %129 = vector.shape_cast %128 : vector<1x16x16xf32> to vector<16x16xf32>
    %130 = vector.shape_cast %127 : vector<16x16xf32> to vector<1x16x16xf32>
    tpu.vector_store %arg5[%c0_80, %c0_81, %c192], %130 {strides = array<i32>} : memref<2x16x256xf32, #tpu.memory_space<vmem>>, vector<1x16x16xf32>,
    %131 = vector.extract_strided_slice %78 {offsets = [0, 234], sizes = [16, 16], strides = [1, 1]} : vector<16x288xf32> to vector<16x16xf32>
    %c0_82 = arith.constant 0 : index
    %c0_83 = arith.constant 0 : index
    %c208 = arith.constant 208 : index
    %132 = vector.load %arg5[%c0_82, %c0_83, %c208] : memref<2x16x256xf32, #tpu.memory_space<vmem>>, vector<1x16x16xf32>
    %133 = vector.shape_cast %132 : vector<1x16x16xf32> to vector<16x16xf32>
    %134 = vector.shape_cast %131 : vector<16x16xf32> to vector<1x16x16xf32>
    tpu.vector_store %arg5[%c0_82, %c0_83, %c208], %134 {strides = array<i32>} : memref<2x16x256xf32, #tpu.memory_space<vmem>>, vector<1x16x16xf32>,
    %135 = vector.extract_strided_slice %78 {offsets = [0, 252], sizes = [16, 16], strides = [1, 1]} : vector<16x288xf32> to vector<16x16xf32>
    %c0_84 = arith.constant 0 : index
    %c0_85 = arith.constant 0 : index
    %c224 = arith.constant 224 : index
    %136 = vector.load %arg5[%c0_84, %c0_85, %c224] : memref<2x16x256xf32, #tpu.memory_space<vmem>>, vector<1x16x16xf32>
    %137 = vector.shape_cast %136 : vector<1x16x16xf32> to vector<16x16xf32>
    %138 = vector.shape_cast %135 : vector<16x16xf32> to vector<1x16x16xf32>
    tpu.vector_store %arg5[%c0_84, %c0_85, %c224], %138 {strides = array<i32>} : memref<2x16x256xf32, #tpu.memory_space<vmem>>, vector<1x16x16xf32>,
    %139 = vector.extract_strided_slice %78 {offsets = [0, 270], sizes = [16, 16], strides = [1, 1]} : vector<16x288xf32> to vector<16x16xf32>
    %c0_86 = arith.constant 0 : index
    %c0_87 = arith.constant 0 : index
    %c240 = arith.constant 240 : index
    %140 = vector.load %arg5[%c0_86, %c0_87, %c240] : memref<2x16x256xf32, #tpu.memory_space<vmem>>, vector<1x16x16xf32>
    %141 = vector.shape_cast %140 : vector<1x16x16xf32> to vector<16x16xf32>
    %142 = vector.shape_cast %139 : vector<16x16xf32> to vector<1x16x16xf32>
    tpu.vector_store %arg5[%c0_86, %c0_87, %c240], %142 {strides = array<i32>} : memref<2x16x256xf32, #tpu.memory_space<vmem>>, vector<1x16x16xf32>,
    %c1_88 = arith.constant 1 : index
    %c0_89 = arith.constant 0 : index
    %c0_90 = arith.constant 0 : index
    %c0_91 = arith.constant 0 : index
    %143 = vector.load %arg1[%c1_88, %c0_89, %c0_90, %c0_91] : memref<2x4x16x16xf32, #tpu.memory_space<vmem>>, vector<1x4x16x16xf32>
    %144 = vector.shape_cast %143 : vector<1x4x16x16xf32> to vector<4x16x16xf32>
    %145 = vector.extract_strided_slice %144 {offsets = [0, 0, 0], sizes = [4, 1, 16], strides = [1, 1, 1]} : vector<4x16x16xf32> to vector<4x1x16xf32>
    %146 = vector.shape_cast %145 : vector<4x1x16xf32> to vector<4x16xf32>
    %c0_92 = arith.constant 0 : index
    %c19_93 = arith.constant 19 : index
    %147 = vector.load %arg6[%c0_92, %c19_93] : memref<4x384xf32, #tpu.memory_space<vmem>>, vector<4x16xf32>
    tpu.vector_store %arg6[%c0_92, %c19_93], %146 {strides = array<i32>} : memref<4x384xf32, #tpu.memory_space<vmem>>, vector<4x16xf32>,
    %148 = vector.extract_strided_slice %144 {offsets = [0, 1, 0], sizes = [4, 1, 16], strides = [1, 1, 1]} : vector<4x16x16xf32> to vector<4x1x16xf32>
    %149 = vector.shape_cast %148 : vector<4x1x16xf32> to vector<4x16xf32>
    %c0_94 = arith.constant 0 : index
    %c37_95 = arith.constant 37 : index
    %150 = vector.load %arg6[%c0_94, %c37_95] : memref<4x384xf32, #tpu.memory_space<vmem>>, vector<4x16xf32>
    tpu.vector_store %arg6[%c0_94, %c37_95], %149 {strides = array<i32>} : memref<4x384xf32, #tpu.memory_space<vmem>>, vector<4x16xf32>,
    %151 = vector.extract_strided_slice %144 {offsets = [0, 2, 0], sizes = [4, 1, 16], strides = [1, 1, 1]} : vector<4x16x16xf32> to vector<4x1x16xf32>
    %152 = vector.shape_cast %151 : vector<4x1x16xf32> to vector<4x16xf32>
    %c0_96 = arith.constant 0 : index
    %c55_97 = arith.constant 55 : index
    %153 = vector.load %arg6[%c0_96, %c55_97] : memref<4x384xf32, #tpu.memory_space<vmem>>, vector<4x16xf32>
    tpu.vector_store %arg6[%c0_96, %c55_97], %152 {strides = array<i32>} : memref<4x384xf32, #tpu.memory_space<vmem>>, vector<4x16xf32>,
    %154 = vector.extract_strided_slice %144 {offsets = [0, 3, 0], sizes = [4, 1, 16], strides = [1, 1, 1]} : vector<4x16x16xf32> to vector<4x1x16xf32>
    %155 = vector.shape_cast %154 : vector<4x1x16xf32> to vector<4x16xf32>
    %c0_98 = arith.constant 0 : index
    %c73_99 = arith.constant 73 : index
    %156 = vector.load %arg6[%c0_98, %c73_99] : memref<4x384xf32, #tpu.memory_space<vmem>>, vector<4x16xf32>
    tpu.vector_store %arg6[%c0_98, %c73_99], %155 {strides = array<i32>} : memref<4x384xf32, #tpu.memory_space<vmem>>, vector<4x16xf32>,
    %157 = vector.extract_strided_slice %144 {offsets = [0, 4, 0], sizes = [4, 1, 16], strides = [1, 1, 1]} : vector<4x16x16xf32> to vector<4x1x16xf32>
    %158 = vector.shape_cast %157 : vector<4x1x16xf32> to vector<4x16xf32>
    %c0_100 = arith.constant 0 : index
    %c91_101 = arith.constant 91 : index
    %159 = vector.load %arg6[%c0_100, %c91_101] : memref<4x384xf32, #tpu.memory_space<vmem>>, vector<4x16xf32>
    tpu.vector_store %arg6[%c0_100, %c91_101], %158 {strides = array<i32>} : memref<4x384xf32, #tpu.memory_space<vmem>>, vector<4x16xf32>,
    %160 = vector.extract_strided_slice %144 {offsets = [0, 5, 0], sizes = [4, 1, 16], strides = [1, 1, 1]} : vector<4x16x16xf32> to vector<4x1x16xf32>
    %161 = vector.shape_cast %160 : vector<4x1x16xf32> to vector<4x16xf32>
    %c0_102 = arith.constant 0 : index
    %c109_103 = arith.constant 109 : index
    %162 = vector.load %arg6[%c0_102, %c109_103] : memref<4x384xf32, #tpu.memory_space<vmem>>, vector<4x16xf32>
    tpu.vector_store %arg6[%c0_102, %c109_103], %161 {strides = array<i32>} : memref<4x384xf32, #tpu.memory_space<vmem>>, vector<4x16xf32>,
    %163 = vector.extract_strided_slice %144 {offsets = [0, 6, 0], sizes = [4, 1, 16], strides = [1, 1, 1]} : vector<4x16x16xf32> to vector<4x1x16xf32>
    %164 = vector.shape_cast %163 : vector<4x1x16xf32> to vector<4x16xf32>
    %c0_104 = arith.constant 0 : index
    %c127_105 = arith.constant 127 : index
    %165 = vector.load %arg6[%c0_104, %c127_105] : memref<4x384xf32, #tpu.memory_space<vmem>>, vector<4x16xf32>
    tpu.vector_store %arg6[%c0_104, %c127_105], %164 {strides = array<i32>} : memref<4x384xf32, #tpu.memory_space<vmem>>, vector<4x16xf32>,
    %166 = vector.extract_strided_slice %144 {offsets = [0, 7, 0], sizes = [4, 1, 16], strides = [1, 1, 1]} : vector<4x16x16xf32> to vector<4x1x16xf32>
    %167 = vector.shape_cast %166 : vector<4x1x16xf32> to vector<4x16xf32>
    %c0_106 = arith.constant 0 : index
    %c145_107 = arith.constant 145 : index
    %168 = vector.load %arg6[%c0_106, %c145_107] : memref<4x384xf32, #tpu.memory_space<vmem>>, vector<4x16xf32>
    tpu.vector_store %arg6[%c0_106, %c145_107], %167 {strides = array<i32>} : memref<4x384xf32, #tpu.memory_space<vmem>>, vector<4x16xf32>,
    %169 = vector.extract_strided_slice %144 {offsets = [0, 8, 0], sizes = [4, 1, 16], strides = [1, 1, 1]} : vector<4x16x16xf32> to vector<4x1x16xf32>
    %170 = vector.shape_cast %169 : vector<4x1x16xf32> to vector<4x16xf32>
    %c0_108 = arith.constant 0 : index
    %c163_109 = arith.constant 163 : index
    %171 = vector.load %arg6[%c0_108, %c163_109] : memref<4x384xf32, #tpu.memory_space<vmem>>, vector<4x16xf32>
    tpu.vector_store %arg6[%c0_108, %c163_109], %170 {strides = array<i32>} : memref<4x384xf32, #tpu.memory_space<vmem>>, vector<4x16xf32>,
    %172 = vector.extract_strided_slice %144 {offsets = [0, 9, 0], sizes = [4, 1, 16], strides = [1, 1, 1]} : vector<4x16x16xf32> to vector<4x1x16xf32>
    %173 = vector.shape_cast %172 : vector<4x1x16xf32> to vector<4x16xf32>
    %c0_110 = arith.constant 0 : index
    %c181_111 = arith.constant 181 : index
    %174 = vector.load %arg6[%c0_110, %c181_111] : memref<4x384xf32, #tpu.memory_space<vmem>>, vector<4x16xf32>
    tpu.vector_store %arg6[%c0_110, %c181_111], %173 {strides = array<i32>} : memref<4x384xf32, #tpu.memory_space<vmem>>, vector<4x16xf32>,
    %175 = vector.extract_strided_slice %144 {offsets = [0, 10, 0], sizes = [4, 1, 16], strides = [1, 1, 1]} : vector<4x16x16xf32> to vector<4x1x16xf32>
    %176 = vector.shape_cast %175 : vector<4x1x16xf32> to vector<4x16xf32>
    %c0_112 = arith.constant 0 : index
    %c199_113 = arith.constant 199 : index
    %177 = vector.load %arg6[%c0_112, %c199_113] : memref<4x384xf32, #tpu.memory_space<vmem>>, vector<4x16xf32>
    tpu.vector_store %arg6[%c0_112, %c199_113], %176 {strides = array<i32>} : memref<4x384xf32, #tpu.memory_space<vmem>>, vector<4x16xf32>,
    %178 = vector.extract_strided_slice %144 {offsets = [0, 11, 0], sizes = [4, 1, 16], strides = [1, 1, 1]} : vector<4x16x16xf32> to vector<4x1x16xf32>
    %179 = vector.shape_cast %178 : vector<4x1x16xf32> to vector<4x16xf32>
    %c0_114 = arith.constant 0 : index
    %c217_115 = arith.constant 217 : index
    %180 = vector.load %arg6[%c0_114, %c217_115] : memref<4x384xf32, #tpu.memory_space<vmem>>, vector<4x16xf32>
    tpu.vector_store %arg6[%c0_114, %c217_115], %179 {strides = array<i32>} : memref<4x384xf32, #tpu.memory_space<vmem>>, vector<4x16xf32>,
    %181 = vector.extract_strided_slice %144 {offsets = [0, 12, 0], sizes = [4, 1, 16], strides = [1, 1, 1]} : vector<4x16x16xf32> to vector<4x1x16xf32>
    %182 = vector.shape_cast %181 : vector<4x1x16xf32> to vector<4x16xf32>
    %c0_116 = arith.constant 0 : index
    %c235_117 = arith.constant 235 : index
    %183 = vector.load %arg6[%c0_116, %c235_117] : memref<4x384xf32, #tpu.memory_space<vmem>>, vector<4x16xf32>
    tpu.vector_store %arg6[%c0_116, %c235_117], %182 {strides = array<i32>} : memref<4x384xf32, #tpu.memory_space<vmem>>, vector<4x16xf32>,
    %184 = vector.extract_strided_slice %144 {offsets = [0, 13, 0], sizes = [4, 1, 16], strides = [1, 1, 1]} : vector<4x16x16xf32> to vector<4x1x16xf32>
    %185 = vector.shape_cast %184 : vector<4x1x16xf32> to vector<4x16xf32>
    %c0_118 = arith.constant 0 : index
    %c253_119 = arith.constant 253 : index
    %186 = vector.load %arg6[%c0_118, %c253_119] : memref<4x384xf32, #tpu.memory_space<vmem>>, vector<4x16xf32>
    tpu.vector_store %arg6[%c0_118, %c253_119], %185 {strides = array<i32>} : memref<4x384xf32, #tpu.memory_space<vmem>>, vector<4x16xf32>,
    %187 = vector.extract_strided_slice %144 {offsets = [0, 14, 0], sizes = [4, 1, 16], strides = [1, 1, 1]} : vector<4x16x16xf32> to vector<4x1x16xf32>
    %188 = vector.shape_cast %187 : vector<4x1x16xf32> to vector<4x16xf32>
    %c0_120 = arith.constant 0 : index
    %c271_121 = arith.constant 271 : index
    %189 = vector.load %arg6[%c0_120, %c271_121] : memref<4x384xf32, #tpu.memory_space<vmem>>, vector<4x16xf32>
    tpu.vector_store %arg6[%c0_120, %c271_121], %188 {strides = array<i32>} : memref<4x384xf32, #tpu.memory_space<vmem>>, vector<4x16xf32>,
    %190 = vector.extract_strided_slice %144 {offsets = [0, 15, 0], sizes = [4, 1, 16], strides = [1, 1, 1]} : vector<4x16x16xf32> to vector<4x1x16xf32>
    %191 = vector.shape_cast %190 : vector<4x1x16xf32> to vector<4x16xf32>
    %c0_122 = arith.constant 0 : index
    %c289_123 = arith.constant 289 : index
    %192 = vector.load %arg6[%c0_122, %c289_123] : memref<4x384xf32, #tpu.memory_space<vmem>>, vector<4x16xf32>
    tpu.vector_store %arg6[%c0_122, %c289_123], %191 {strides = array<i32>} : memref<4x384xf32, #tpu.memory_space<vmem>>, vector<4x16xf32>,
    %c0_124 = arith.constant 0 : index
    %c0_125 = arith.constant 0 : index
    %193 = vector.load %arg6[%c0_124, %c0_125] : memref<4x384xf32, #tpu.memory_space<vmem>>, vector<4x288xf32>
    %c0_126 = arith.constant 0 : index
    %c0_127 = arith.constant 0 : index
    %194 = vector.load %arg7[%c0_126, %c0_127] : memref<36x288xf32, #tpu.memory_space<vmem>>, vector<4x288xf32>
    tpu.vector_store %arg7[%c0_126, %c0_127], %193 {strides = array<i32>} : memref<36x288xf32, #tpu.memory_space<vmem>>, vector<4x288xf32>,
    %c0_128 = arith.constant 0 : index
    %c1_129 = arith.constant 1 : index
    %195 = vector.load %arg6[%c0_128, %c1_129] : memref<4x384xf32, #tpu.memory_space<vmem>>, vector<4x288xf32>
    %c4_130 = arith.constant 4 : index
    %c0_131 = arith.constant 0 : index
    %196 = vector.load %arg7[%c4_130, %c0_131] : memref<36x288xf32, #tpu.memory_space<vmem>>, vector<4x288xf32>
    tpu.vector_store %arg7[%c4_130, %c0_131], %195 {strides = array<i32>} : memref<36x288xf32, #tpu.memory_space<vmem>>, vector<4x288xf32>,
    %c0_132 = arith.constant 0 : index
    %c2_133 = arith.constant 2 : index
    %197 = vector.load %arg6[%c0_132, %c2_133] : memref<4x384xf32, #tpu.memory_space<vmem>>, vector<4x288xf32>
    %c8_134 = arith.constant 8 : index
    %c0_135 = arith.constant 0 : index
    %198 = vector.load %arg7[%c8_134, %c0_135] : memref<36x288xf32, #tpu.memory_space<vmem>>, vector<4x288xf32>
    tpu.vector_store %arg7[%c8_134, %c0_135], %197 {strides = array<i32>} : memref<36x288xf32, #tpu.memory_space<vmem>>, vector<4x288xf32>,
    %c0_136 = arith.constant 0 : index
    %c18_137 = arith.constant 18 : index
    %199 = vector.load %arg6[%c0_136, %c18_137] : memref<4x384xf32, #tpu.memory_space<vmem>>, vector<4x288xf32>
    %c12_138 = arith.constant 12 : index
    %c0_139 = arith.constant 0 : index
    %200 = vector.load %arg7[%c12_138, %c0_139] : memref<36x288xf32, #tpu.memory_space<vmem>>, vector<4x288xf32>
    tpu.vector_store %arg7[%c12_138, %c0_139], %199 {strides = array<i32>} : memref<36x288xf32, #tpu.memory_space<vmem>>, vector<4x288xf32>,
    %c0_140 = arith.constant 0 : index
    %c19_141 = arith.constant 19 : index
    %201 = vector.load %arg6[%c0_140, %c19_141] : memref<4x384xf32, #tpu.memory_space<vmem>>, vector<4x288xf32>
    %c16_142 = arith.constant 16 : index
    %c0_143 = arith.constant 0 : index
    %202 = vector.load %arg7[%c16_142, %c0_143] : memref<36x288xf32, #tpu.memory_space<vmem>>, vector<4x288xf32>
    tpu.vector_store %arg7[%c16_142, %c0_143], %201 {strides = array<i32>} : memref<36x288xf32, #tpu.memory_space<vmem>>, vector<4x288xf32>,
    %c0_144 = arith.constant 0 : index
    %c20_145 = arith.constant 20 : index
    %203 = vector.load %arg6[%c0_144, %c20_145] : memref<4x384xf32, #tpu.memory_space<vmem>>, vector<4x288xf32>
    %c20_146 = arith.constant 20 : index
    %c0_147 = arith.constant 0 : index
    %204 = vector.load %arg7[%c20_146, %c0_147] : memref<36x288xf32, #tpu.memory_space<vmem>>, vector<4x288xf32>
    tpu.vector_store %arg7[%c20_146, %c0_147], %203 {strides = array<i32>} : memref<36x288xf32, #tpu.memory_space<vmem>>, vector<4x288xf32>,
    %c0_148 = arith.constant 0 : index
    %c36_149 = arith.constant 36 : index
    %205 = vector.load %arg6[%c0_148, %c36_149] : memref<4x384xf32, #tpu.memory_space<vmem>>, vector<4x288xf32>
    %c24_150 = arith.constant 24 : index
    %c0_151 = arith.constant 0 : index
    %206 = vector.load %arg7[%c24_150, %c0_151] : memref<36x288xf32, #tpu.memory_space<vmem>>, vector<4x288xf32>
    tpu.vector_store %arg7[%c24_150, %c0_151], %205 {strides = array<i32>} : memref<36x288xf32, #tpu.memory_space<vmem>>, vector<4x288xf32>,
    %c0_152 = arith.constant 0 : index
    %c37_153 = arith.constant 37 : index
    %207 = vector.load %arg6[%c0_152, %c37_153] : memref<4x384xf32, #tpu.memory_space<vmem>>, vector<4x288xf32>
    %c28_154 = arith.constant 28 : index
    %c0_155 = arith.constant 0 : index
    %208 = vector.load %arg7[%c28_154, %c0_155] : memref<36x288xf32, #tpu.memory_space<vmem>>, vector<4x288xf32>
    tpu.vector_store %arg7[%c28_154, %c0_155], %207 {strides = array<i32>} : memref<36x288xf32, #tpu.memory_space<vmem>>, vector<4x288xf32>,
    %c0_156 = arith.constant 0 : index
    %c38_157 = arith.constant 38 : index
    %209 = vector.load %arg6[%c0_156, %c38_157] : memref<4x384xf32, #tpu.memory_space<vmem>>, vector<4x288xf32>
    %c32_158 = arith.constant 32 : index
    %c0_159 = arith.constant 0 : index
    %210 = vector.load %arg7[%c32_158, %c0_159] : memref<36x288xf32, #tpu.memory_space<vmem>>, vector<4x288xf32>
    tpu.vector_store %arg7[%c32_158, %c0_159], %209 {strides = array<i32>} : memref<36x288xf32, #tpu.memory_space<vmem>>, vector<4x288xf32>,
    %c0_160 = arith.constant 0 : index
    %c0_161 = arith.constant 0 : index
    %211 = vector.load %arg2[%c0_160, %c0_161] : memref<16x36xf32, #tpu.memory_space<vmem>>, vector<16x36xf32>
    %c0_162 = arith.constant 0 : index
    %c0_163 = arith.constant 0 : index
    %212 = vector.load %arg7[%c0_162, %c0_163] : memref<36x288xf32, #tpu.memory_space<vmem>>, vector<36x288xf32>
    %cst_164 = arith.constant dense<0.000000e+00> : vector<16x288xf32>
    %213 = tpu.matmul %211, %212, %cst_164 {dimension_numbers = #tpu.dot_dimension_numbers<[1], [0], [0], [1], [0, 0, 1, 1], [], []>} : vector<16x36xf32>, vector<36x288xf32>, vector<16x288xf32> -> vector<16x288xf32>
    %c0_165 = arith.constant 0 : index
    %c0_166 = arith.constant 0 : index
    %214 = vector.load %arg3[%c0_165, %c0_166] : memref<16x1xf32, #tpu.memory_space<vmem>>, vector<16x1xf32>
    %215 = vector.broadcast %214 : vector<16x1xf32> to vector<16x288xf32>
    %216 = arith.addf %213, %215 : vector<16x288xf32>
    %c0_167 = arith.constant 0 : index
    %c0_168 = arith.constant 0 : index
    %217 = vector.load %arg4[%c0_167, %c0_168] : memref<1x288xf32, #tpu.memory_space<vmem>>, vector<1x288xf32>
    %218 = vector.broadcast %217 : vector<1x288xf32> to vector<16x288xf32>
    %219 = arith.mulf %216, %218 : vector<16x288xf32>
    %220 = vector.extract_strided_slice %219 {offsets = [0, 0], sizes = [16, 16], strides = [1, 1]} : vector<16x288xf32> to vector<16x16xf32>
    %c1_169 = arith.constant 1 : index
    %c0_170 = arith.constant 0 : index
    %c0_171 = arith.constant 0 : index
    %221 = vector.load %arg5[%c1_169, %c0_170, %c0_171] : memref<2x16x256xf32, #tpu.memory_space<vmem>>, vector<1x16x16xf32>
    %222 = vector.shape_cast %221 : vector<1x16x16xf32> to vector<16x16xf32>
    %223 = vector.shape_cast %220 : vector<16x16xf32> to vector<1x16x16xf32>
    tpu.vector_store %arg5[%c1_169, %c0_170, %c0_171], %223 {strides = array<i32>} : memref<2x16x256xf32, #tpu.memory_space<vmem>>, vector<1x16x16xf32>,
    %224 = vector.extract_strided_slice %219 {offsets = [0, 18], sizes = [16, 16], strides = [1, 1]} : vector<16x288xf32> to vector<16x16xf32>
    %c1_172 = arith.constant 1 : index
    %c0_173 = arith.constant 0 : index
    %c16_174 = arith.constant 16 : index
    %225 = vector.load %arg5[%c1_172, %c0_173, %c16_174] : memref<2x16x256xf32, #tpu.memory_space<vmem>>, vector<1x16x16xf32>
    %226 = vector.shape_cast %225 : vector<1x16x16xf32> to vector<16x16xf32>
    %227 = vector.shape_cast %224 : vector<16x16xf32> to vector<1x16x16xf32>
    tpu.vector_store %arg5[%c1_172, %c0_173, %c16_174], %227 {strides = array<i32>} : memref<2x16x256xf32, #tpu.memory_space<vmem>>, vector<1x16x16xf32>,
    %228 = vector.extract_strided_slice %219 {offsets = [0, 36], sizes = [16, 16], strides = [1, 1]} : vector<16x288xf32> to vector<16x16xf32>
    %c1_175 = arith.constant 1 : index
    %c0_176 = arith.constant 0 : index
    %c32_177 = arith.constant 32 : index
    %229 = vector.load %arg5[%c1_175, %c0_176, %c32_177] : memref<2x16x256xf32, #tpu.memory_space<vmem>>, vector<1x16x16xf32>
    %230 = vector.shape_cast %229 : vector<1x16x16xf32> to vector<16x16xf32>
    %231 = vector.shape_cast %228 : vector<16x16xf32> to vector<1x16x16xf32>
    tpu.vector_store %arg5[%c1_175, %c0_176, %c32_177], %231 {strides = array<i32>} : memref<2x16x256xf32, #tpu.memory_space<vmem>>, vector<1x16x16xf32>,
    %232 = vector.extract_strided_slice %219 {offsets = [0, 54], sizes = [16, 16], strides = [1, 1]} : vector<16x288xf32> to vector<16x16xf32>
    %c1_178 = arith.constant 1 : index
    %c0_179 = arith.constant 0 : index
    %c48_180 = arith.constant 48 : index
    %233 = vector.load %arg5[%c1_178, %c0_179, %c48_180] : memref<2x16x256xf32, #tpu.memory_space<vmem>>, vector<1x16x16xf32>
    %234 = vector.shape_cast %233 : vector<1x16x16xf32> to vector<16x16xf32>
    %235 = vector.shape_cast %232 : vector<16x16xf32> to vector<1x16x16xf32>
    tpu.vector_store %arg5[%c1_178, %c0_179, %c48_180], %235 {strides = array<i32>} : memref<2x16x256xf32, #tpu.memory_space<vmem>>, vector<1x16x16xf32>,
    %236 = vector.extract_strided_slice %219 {offsets = [0, 72], sizes = [16, 16], strides = [1, 1]} : vector<16x288xf32> to vector<16x16xf32>
    %c1_181 = arith.constant 1 : index
    %c0_182 = arith.constant 0 : index
    %c64_183 = arith.constant 64 : index
    %237 = vector.load %arg5[%c1_181, %c0_182, %c64_183] : memref<2x16x256xf32, #tpu.memory_space<vmem>>, vector<1x16x16xf32>
    %238 = vector.shape_cast %237 : vector<1x16x16xf32> to vector<16x16xf32>
    %239 = vector.shape_cast %236 : vector<16x16xf32> to vector<1x16x16xf32>
    tpu.vector_store %arg5[%c1_181, %c0_182, %c64_183], %239 {strides = array<i32>} : memref<2x16x256xf32, #tpu.memory_space<vmem>>, vector<1x16x16xf32>,
    %240 = vector.extract_strided_slice %219 {offsets = [0, 90], sizes = [16, 16], strides = [1, 1]} : vector<16x288xf32> to vector<16x16xf32>
    %c1_184 = arith.constant 1 : index
    %c0_185 = arith.constant 0 : index
    %c80_186 = arith.constant 80 : index
    %241 = vector.load %arg5[%c1_184, %c0_185, %c80_186] : memref<2x16x256xf32, #tpu.memory_space<vmem>>, vector<1x16x16xf32>
    %242 = vector.shape_cast %241 : vector<1x16x16xf32> to vector<16x16xf32>
    %243 = vector.shape_cast %240 : vector<16x16xf32> to vector<1x16x16xf32>
    tpu.vector_store %arg5[%c1_184, %c0_185, %c80_186], %243 {strides = array<i32>} : memref<2x16x256xf32, #tpu.memory_space<vmem>>, vector<1x16x16xf32>,
    %244 = vector.extract_strided_slice %219 {offsets = [0, 108], sizes = [16, 16], strides = [1, 1]} : vector<16x288xf32> to vector<16x16xf32>
    %c1_187 = arith.constant 1 : index
    %c0_188 = arith.constant 0 : index
    %c96_189 = arith.constant 96 : index
    %245 = vector.load %arg5[%c1_187, %c0_188, %c96_189] : memref<2x16x256xf32, #tpu.memory_space<vmem>>, vector<1x16x16xf32>
    %246 = vector.shape_cast %245 : vector<1x16x16xf32> to vector<16x16xf32>
    %247 = vector.shape_cast %244 : vector<16x16xf32> to vector<1x16x16xf32>
    tpu.vector_store %arg5[%c1_187, %c0_188, %c96_189], %247 {strides = array<i32>} : memref<2x16x256xf32, #tpu.memory_space<vmem>>, vector<1x16x16xf32>,
    %248 = vector.extract_strided_slice %219 {offsets = [0, 126], sizes = [16, 16], strides = [1, 1]} : vector<16x288xf32> to vector<16x16xf32>
    %c1_190 = arith.constant 1 : index
    %c0_191 = arith.constant 0 : index
    %c112_192 = arith.constant 112 : index
    %249 = vector.load %arg5[%c1_190, %c0_191, %c112_192] : memref<2x16x256xf32, #tpu.memory_space<vmem>>, vector<1x16x16xf32>
    %250 = vector.shape_cast %249 : vector<1x16x16xf32> to vector<16x16xf32>
    %251 = vector.shape_cast %248 : vector<16x16xf32> to vector<1x16x16xf32>
    tpu.vector_store %arg5[%c1_190, %c0_191, %c112_192], %251 {strides = array<i32>} : memref<2x16x256xf32, #tpu.memory_space<vmem>>, vector<1x16x16xf32>,
    %252 = vector.extract_strided_slice %219 {offsets = [0, 144], sizes = [16, 16], strides = [1, 1]} : vector<16x288xf32> to vector<16x16xf32>
    %c1_193 = arith.constant 1 : index
    %c0_194 = arith.constant 0 : index
    %c128_195 = arith.constant 128 : index
    %253 = vector.load %arg5[%c1_193, %c0_194, %c128_195] : memref<2x16x256xf32, #tpu.memory_space<vmem>>, vector<1x16x16xf32>
    %254 = vector.shape_cast %253 : vector<1x16x16xf32> to vector<16x16xf32>
    %255 = vector.shape_cast %252 : vector<16x16xf32> to vector<1x16x16xf32>
    tpu.vector_store %arg5[%c1_193, %c0_194, %c128_195], %255 {strides = array<i32>} : memref<2x16x256xf32, #tpu.memory_space<vmem>>, vector<1x16x16xf32>,
    %256 = vector.extract_strided_slice %219 {offsets = [0, 162], sizes = [16, 16], strides = [1, 1]} : vector<16x288xf32> to vector<16x16xf32>
    %c1_196 = arith.constant 1 : index
    %c0_197 = arith.constant 0 : index
    %c144_198 = arith.constant 144 : index
    %257 = vector.load %arg5[%c1_196, %c0_197, %c144_198] : memref<2x16x256xf32, #tpu.memory_space<vmem>>, vector<1x16x16xf32>
    %258 = vector.shape_cast %257 : vector<1x16x16xf32> to vector<16x16xf32>
    %259 = vector.shape_cast %256 : vector<16x16xf32> to vector<1x16x16xf32>
    tpu.vector_store %arg5[%c1_196, %c0_197, %c144_198], %259 {strides = array<i32>} : memref<2x16x256xf32, #tpu.memory_space<vmem>>, vector<1x16x16xf32>,
    %260 = vector.extract_strided_slice %219 {offsets = [0, 180], sizes = [16, 16], strides = [1, 1]} : vector<16x288xf32> to vector<16x16xf32>
    %c1_199 = arith.constant 1 : index
    %c0_200 = arith.constant 0 : index
    %c160_201 = arith.constant 160 : index
    %261 = vector.load %arg5[%c1_199, %c0_200, %c160_201] : memref<2x16x256xf32, #tpu.memory_space<vmem>>, vector<1x16x16xf32>
    %262 = vector.shape_cast %261 : vector<1x16x16xf32> to vector<16x16xf32>
    %263 = vector.shape_cast %260 : vector<16x16xf32> to vector<1x16x16xf32>
    tpu.vector_store %arg5[%c1_199, %c0_200, %c160_201], %263 {strides = array<i32>} : memref<2x16x256xf32, #tpu.memory_space<vmem>>, vector<1x16x16xf32>,
    %264 = vector.extract_strided_slice %219 {offsets = [0, 198], sizes = [16, 16], strides = [1, 1]} : vector<16x288xf32> to vector<16x16xf32>
    %c1_202 = arith.constant 1 : index
    %c0_203 = arith.constant 0 : index
    %c176_204 = arith.constant 176 : index
    %265 = vector.load %arg5[%c1_202, %c0_203, %c176_204] : memref<2x16x256xf32, #tpu.memory_space<vmem>>, vector<1x16x16xf32>
    %266 = vector.shape_cast %265 : vector<1x16x16xf32> to vector<16x16xf32>
    %267 = vector.shape_cast %264 : vector<16x16xf32> to vector<1x16x16xf32>
    tpu.vector_store %arg5[%c1_202, %c0_203, %c176_204], %267 {strides = array<i32>} : memref<2x16x256xf32, #tpu.memory_space<vmem>>, vector<1x16x16xf32>,
    %268 = vector.extract_strided_slice %219 {offsets = [0, 216], sizes = [16, 16], strides = [1, 1]} : vector<16x288xf32> to vector<16x16xf32>
    %c1_205 = arith.constant 1 : index
    %c0_206 = arith.constant 0 : index
    %c192_207 = arith.constant 192 : index
    %269 = vector.load %arg5[%c1_205, %c0_206, %c192_207] : memref<2x16x256xf32, #tpu.memory_space<vmem>>, vector<1x16x16xf32>
    %270 = vector.shape_cast %269 : vector<1x16x16xf32> to vector<16x16xf32>
    %271 = vector.shape_cast %268 : vector<16x16xf32> to vector<1x16x16xf32>
    tpu.vector_store %arg5[%c1_205, %c0_206, %c192_207], %271 {strides = array<i32>} : memref<2x16x256xf32, #tpu.memory_space<vmem>>, vector<1x16x16xf32>,
    %272 = vector.extract_strided_slice %219 {offsets = [0, 234], sizes = [16, 16], strides = [1, 1]} : vector<16x288xf32> to vector<16x16xf32>
    %c1_208 = arith.constant 1 : index
    %c0_209 = arith.constant 0 : index
    %c208_210 = arith.constant 208 : index
    %273 = vector.load %arg5[%c1_208, %c0_209, %c208_210] : memref<2x16x256xf32, #tpu.memory_space<vmem>>, vector<1x16x16xf32>
    %274 = vector.shape_cast %273 : vector<1x16x16xf32> to vector<16x16xf32>
    %275 = vector.shape_cast %272 : vector<16x16xf32> to vector<1x16x16xf32>
    tpu.vector_store %arg5[%c1_208, %c0_209, %c208_210], %275 {strides = array<i32>} : memref<2x16x256xf32, #tpu.memory_space<vmem>>, vector<1x16x16xf32>,
    %276 = vector.extract_strided_slice %219 {offsets = [0, 252], sizes = [16, 16], strides = [1, 1]} : vector<16x288xf32> to vector<16x16xf32>
    %c1_211 = arith.constant 1 : index
    %c0_212 = arith.constant 0 : index
    %c224_213 = arith.constant 224 : index
    %277 = vector.load %arg5[%c1_211, %c0_212, %c224_213] : memref<2x16x256xf32, #tpu.memory_space<vmem>>, vector<1x16x16xf32>
    %278 = vector.shape_cast %277 : vector<1x16x16xf32> to vector<16x16xf32>
    %279 = vector.shape_cast %276 : vector<16x16xf32> to vector<1x16x16xf32>
    tpu.vector_store %arg5[%c1_211, %c0_212, %c224_213], %279 {strides = array<i32>} : memref<2x16x256xf32, #tpu.memory_space<vmem>>, vector<1x16x16xf32>,
    %280 = vector.extract_strided_slice %219 {offsets = [0, 270], sizes = [16, 16], strides = [1, 1]} : vector<16x288xf32> to vector<16x16xf32>
    %c1_214 = arith.constant 1 : index
    %c0_215 = arith.constant 0 : index
    %c240_216 = arith.constant 240 : index
    %281 = vector.load %arg5[%c1_214, %c0_215, %c240_216] : memref<2x16x256xf32, #tpu.memory_space<vmem>>, vector<1x16x16xf32>
    %282 = vector.shape_cast %281 : vector<1x16x16xf32> to vector<16x16xf32>
    %283 = vector.shape_cast %280 : vector<16x16xf32> to vector<1x16x16xf32>
    tpu.vector_store %arg5[%c1_214, %c0_215, %c240_216], %283 {strides = array<i32>} : memref<2x16x256xf32, #tpu.memory_space<vmem>>, vector<1x16x16xf32>,
    return
  }
  func.func @transform_0(%arg0: i32) -> (i32, i32, i32, i32) {
    %c0_i32 = arith.constant 0 : i32
    %c0_i32_0 = arith.constant 0 : i32
    %c0_i32_1 = arith.constant 0 : i32
    %c0_i32_2 = arith.constant 0 : i32
    return %arg0, %c0_i32, %c0_i32_0, %c0_i32_1 : i32, i32, i32, i32
  }
  func.func @transform_1(%arg0: i32) -> (i32, i32) {
    %c0_i32 = arith.constant 0 : i32
    %c0_i32_0 = arith.constant 0 : i32
    %c0_i32_1 = arith.constant 0 : i32
    return %c0_i32, %c0_i32_0 : i32, i32
  }
  func.func @transform_2(%arg0: i32) -> (i32, i32) {
    %c0_i32 = arith.constant 0 : i32
    %c0_i32_0 = arith.constant 0 : i32
    %c0_i32_1 = arith.constant 0 : i32
    return %c0_i32, %c0_i32_0 : i32, i32
  }
  func.func @transform_3(%arg0: i32) -> (i32, i32) {
    %c0_i32 = arith.constant 0 : i32
    %c0_i32_0 = arith.constant 0 : i32
    %c0_i32_1 = arith.constant 0 : i32
    return %c0_i32, %c0_i32_0 : i32, i32
  }
  func.func @transform_4(%arg0: i32) -> (i32, i32, i32) {
    %c0_i32 = arith.constant 0 : i32
    %c0_i32_0 = arith.constant 0 : i32
    %c0_i32_1 = arith.constant 0 : i32
    return %arg0, %c0_i32, %c0_i32_0 : i32, i32, i32
  }
}

</mosaic_0001>

<llo_original>
// kernel: tile.8
$region0: #{tile.8}
  #allocation0 [shape = 's32[1]{0}', space=sflag, size = 0x4, scoped, tag = 'scoped memory for tile.8']
  %s0 = inlined_call_operand.vmem [shape: f32[18], index: 0, kind: input, shape index: {}]
  %s1 = inlined_call_operand.vmem [shape: f32[16,18], index: 1, kind: output, shape index: {}]
  // Predicated region
  $region2: #{tile.8} parent=0 // pred_check
    _
  $region3: #{tile.8} parent=0 // pred_check_branch
    %3 = sbr.rel (0) target = $region5
  $region4: #{tile.8} parent=0 // pred_region
    _
  $region5: #{tile.8} parent=0 // pred_fallthru
    _
  %v4 = vld [vmem:[%s0] ss:$0 sm:$0xff]
  %5 = vst [vmem:[%s1] sm:$0xff] %v4
  %s6 = scalar_lea.vmem %s1, 8
  %7 = vst [vmem:[%s6] sm:$0xff] %v4

// kernel: tile.9
$region0: #{tile.9}
  %s0 = inlined_call_operand.vmem [shape: f32[16,18], index: 0, kind: input, shape index: {}]
  %s1 = inlined_call_operand.vmem [shape: f32[1,288], index: 1, kind: output, shape index: {}]
  $region1: #{tile.9} parent=0
    #allocation0 [shape = 'u8[12288]{0}', space=vmem, size = 0x3000, scoped, tag = 'scoped mem for output reshape']
    %v2 = vld [vmem:[%s0] sm:$0x1]
    %vm3 = vcmask 146432
    %4 = vst.msk [vmem:[#allocation0] sm:$0x1] %vm3, %v2
    %s5 = scalar_lea.vmem %s0, 7
    %v6 = vld [vmem:[%s5] sm:$0x1]
    %s7 = scalar_lea.vmem %s0, 7
    %v8 = vld [vmem:[%s7] sm:$0x1]
    %vm9 = vcmask 15360
    %v10 = vsel %vm9, %v8, %v6
    %11 = vrot.lane.b32.xlu0 %v10, 126
    %v12 = vpop.permute.xlu0 %11
    %vm13 = vcmask 130048
    %s14 = scalar_lea.vmem [#allocation0], 8
    %15 = vst.msk [vmem:[%s14] sm:$0x1] %vm13, %v12
    %vm16 = vcmask 1048560
    %17 = vst.msk [vmem:[#allocation0] sm:$0x1] %vm16, %v12
    %s18 = scalar_lea.vmem %s0, 14
    %v19 = vld [vmem:[%s18] sm:$0x1]
    %s20 = scalar_lea.vmem %s0, 14
    %v21 = vld [vmem:[%s20] sm:$0x1]
    %vm22 = vcmask 31744
    %v23 = vsel %vm22, %v21, %v19
    %24 = vrot.lane.b32.xlu0 %v23, 124
    %v25 = vpop.permute.xlu0 %24
    %vm26 = vcmask 113664
    %s27 = scalar_lea.vmem [#allocation0], 16
    %28 = vst.msk [vmem:[%s27] sm:$0x1] %vm26, %v25
    %vm29 = vcmask 1048544
    %s30 = scalar_lea.vmem [#allocation0], 8
    %31 = vst.msk [vmem:[%s30] sm:$0x1] %vm29, %v25
    %s32 = scalar_lea.vmem %s0, 6
    %v33 = vld [vmem:[%s32] sm:$0x1]
    %34 = vrot.lane.b32.xlu0 %v33, 108
    %v35 = vpop.permute.xlu0 %34
    %vm36 = vcmask 1032032
    %37 = vst.msk [vmem:[#allocation0] sm:$0x1] %vm36, %v35
    %s38 = scalar_lea.vmem %s0, 13
    %v39 = vld [vmem:[%s38] sm:$0x1]
    %40 = vrot.lane.b32.xlu0 %v39, 106
    %v41 = vpop.permute.xlu0 %40
    %vm42 = vcmask 1015632
    %s43 = scalar_lea.vmem [#allocation0], 8
    %44 = vst.msk [vmem:[%s43] sm:$0x1] %vm42, %v41
    %s45 = scalar_lea.vmem %s0, 5
    %v46 = vld [vmem:[%s45] sm:$0x1]
    %47 = vrot.lane.b32.xlu0 %v46, 90
    %v48 = vpop.permute.xlu0 %47
    %vm49 = vcmask 884432
    %50 = vst.msk [vmem:[#allocation0] sm:$0x1] %vm49, %v48
    %s51 = scalar_lea.vmem %s0, 12
    %v52 = vld [vmem:[%s51] sm:$0x1]
    %53 = vrot.lane.b32.xlu0 %v52, 88
    %v54 = vpop.permute.xlu0 %53
    %vm55 = vcmask 868032
    %s56 = scalar_lea.vmem [#allocation0], 8
    %57 = vst.msk [vmem:[%s56] sm:$0x1] %vm55, %v54
    %s58 = scalar_lea.vmem %s0, 4
    %v59 = vld [vmem:[%s58] sm:$0x1]
    %60 = vrot.lane.b32.xlu0 %v59, 72
    %v61 = vpop.permute.xlu0 %60
    %vm62 = vcmask 736832
    %63 = vst.msk [vmem:[#allocation0] sm:$0x1] %vm62, %v61
    %s64 = scalar_lea.vmem %s0, 11
    %v65 = vld [vmem:[%s64] sm:$0x1]
    %66 = vrot.lane.b32.xlu0 %v65, 70
    %v67 = vpop.permute.xlu0 %66
    %vm68 = vcmask 720432
    %s69 = scalar_lea.vmem [#allocation0], 8
    %70 = vst.msk [vmem:[%s69] sm:$0x1] %vm68, %v67
    %s71 = scalar_lea.vmem %s0, 3
    %v72 = vld [vmem:[%s71] sm:$0x1]
    %73 = vrot.lane.b32.xlu0 %v72, 54
    %v74 = vpop.permute.xlu0 %73
    %vm75 = vcmask 589232
    %76 = vst.msk [vmem:[#allocation0] sm:$0x1] %vm75, %v74
    %s77 = scalar_lea.vmem %s0, 10
    %v78 = vld [vmem:[%s77] sm:$0x1]
    %79 = vrot.lane.b32.xlu0 %v78, 52
    %v80 = vpop.permute.xlu0 %79
    %vm81 = vcmask 572832
    %s82 = scalar_lea.vmem [#allocation0], 8
    %83 = vst.msk [vmem:[%s82] sm:$0x1] %vm81, %v80
    %s84 = scalar_lea.vmem %s0, 2
    %v85 = vld [vmem:[%s84] sm:$0x1]
    %86 = vrot.lane.b32.xlu0 %v85, 36
    %v87 = vpop.permute.xlu0 %86
    %vm88 = vcmask 441632
    %89 = vst.msk [vmem:[#allocation0] sm:$0x1] %vm88, %v87
    %s90 = scalar_lea.vmem %s0, 9
    %v91 = vld [vmem:[%s90] sm:$0x1]
    %92 = vrot.lane.b32.xlu0 %v91, 34
    %v93 = vpop.permute.xlu0 %92
    %vm94 = vcmask 425232
    %s95 = scalar_lea.vmem [#allocation0], 8
    %96 = vst.msk [vmem:[%s95] sm:$0x1] %vm94, %v93
    %s97 = scalar_lea.vmem %s0, 1
    %v98 = vld [vmem:[%s97] sm:$0x1]
    %99 = vrot.lane.b32.xlu0 %v98, 18
    %v100 = vpop.permute.xlu0 %99
    %vm101 = vcmask 294032
    %102 = vst.msk [vmem:[#allocation0] sm:$0x1] %vm101, %v100
    %s103 = scalar_lea.vmem %s0, 8
    %v104 = vld [vmem:[%s103] sm:$0x1]
    %105 = vrot.lane.b32.xlu0 %v104, 16
    %v106 = vpop.permute.xlu0 %105
    %vm107 = vcmask 277632
    %s108 = scalar_lea.vmem [#allocation0], 8
    %109 = vst.msk [vmem:[%s108] sm:$0x1] %vm107, %v106
    %s110 = scalar_lea.vmem %s0, 15
    %v111 = vld [vmem:[%s110] sm:$0x1]
    %112 = vrot.lane.b32.xlu0 %v111, 14
    %v113 = vpop.permute.xlu0 %112
    %vm114 = vcmask 261232
    %s115 = scalar_lea.vmem [#allocation0], 16
    %116 = vst.msk [vmem:[%s115] sm:$0x1] %vm114, %v113
    %s118 = sshllo.u32 0, 1
    %v120 = vld [vmem:[#allocation0] sm:%s118]
    %s121 = sshllo.u32 0, 1
    %122 = vst [vmem:[%s1] sm:%s121] %v120
    %s123 = scalar_lea.vmem [#allocation0], 8
    %v124 = vld [vmem:[%s123] sm:%s118]
    %s125 = sshllo.u32 0, 1
    %s126 = scalar_lea.vmem %s1, 1
    %127 = vst [vmem:[%s126] sm:%s125] %v124
    %s128 = scalar_lea.vmem [#allocation0], 16
    %v129 = vld [vmem:[%s128] sm:%s118]
    %s130 = sshllo.u32 0, 1
    %s131 = smul.addr 1, 2
    %s132 = scalar_lea.vmem %s1, %s131
    %133 = vst [vmem:[%s132] sm:%s130] %v129

// kernel: _scaling_conv_adapter_impl.1
$region0: #{_scaling_conv_adapter_impl.1}
  #allocation0 [shape = 'u32[]', space=smem, size = 0x4, offset = 0x4, fixed_abs, tag = 'smem constant byte address 0x4 - core index']
  #allocation1 [shape = 'u32[144,128]{1,0:T(1,128)}', space=vmem, size = 0x12000, scoped, tag = 'internal scratch']
  #allocation2 [shape = 'f32[4,384]{1,0:T(4,128)}', space=vmem, size = 0x1800, scoped, tag = 'scratch operand']
  #allocation3 [shape = 'f32[36,288]{1,0:T(8,128)}', space=vmem, size = 0xf000, scoped, tag = 'scratch operand']
  %s0 = inlined_call_operand.vmem [shape: f32[2,4,16,16], index: 0, kind: input, shape index: {}]
  %s1 = inlined_call_operand.vmem [shape: f32[16,36], index: 1, kind: input, shape index: {}]
  %s2 = inlined_call_operand.vmem [shape: f32[16,1], index: 2, kind: input, shape index: {}]
  %s3 = inlined_call_operand.vmem [shape: f32[1,288], index: 3, kind: input, shape index: {}]
  %s4 = inlined_call_operand.vmem [shape: f32[2,16,256], index: 4, kind: output, shape index: {}]
  %s5 = sld [smem:[#allocation0]]
  $region26: #{_scaling_conv_adapter_impl.1} parent=0
    _
  %s7 = ssub.s32 1, %s5
  %s8 = scalar_select 0, %s7, %s5
  // Predicated region
  $region2: #{_scaling_conv_adapter_impl.1} parent=0 // pred_check
    _
  $region3: #{_scaling_conv_adapter_impl.1} parent=0 // pred_check_branch
    %10 = sbr.rel (0) target = $region5
  $region4: #{_scaling_conv_adapter_impl.1} parent=0 // pred_region
    _
  $region5: #{_scaling_conv_adapter_impl.1} parent=0 // pred_fallthru
    _
  // Predicated region
  $region6: #{_scaling_conv_adapter_impl.1} parent=0 // pred_check
    _
  $region7: #{_scaling_conv_adapter_impl.1} parent=0 // pred_check_branch
    %12 = sbr.rel (0) target = $region9
  $region8: #{_scaling_conv_adapter_impl.1} parent=0 // pred_region
    _
  $region9: #{_scaling_conv_adapter_impl.1} parent=0 // pred_fallthru
    _
  // Predicated region
  $region10: #{_scaling_conv_adapter_impl.1} parent=0 // pred_check
    _
  $region11: #{_scaling_conv_adapter_impl.1} parent=0 // pred_check_branch
    %14 = sbr.rel (0) target = $region13
  $region12: #{_scaling_conv_adapter_impl.1} parent=0 // pred_region
    _
  $region13: #{_scaling_conv_adapter_impl.1} parent=0 // pred_fallthru
    _
  // Predicated region
  $region14: #{_scaling_conv_adapter_impl.1} parent=0 // pred_check
    _
  $region15: #{_scaling_conv_adapter_impl.1} parent=0 // pred_check_branch
    %16 = sbr.rel (0) target = $region17
  $region16: #{_scaling_conv_adapter_impl.1} parent=0 // pred_region
    _
  $region17: #{_scaling_conv_adapter_impl.1} parent=0 // pred_fallthru
    _
  %17 = vst [vmem:[#allocation2] sm:$0xff] 0.0
  %18 = vst [vmem:[#allocation2 + $0x8] sm:$0xf] 0.0
  %v19 = vld [vmem:[%s0] sm:$0xff]
  %v20 = vld [vmem:[%s0 + $0x8] sm:$0xff]
  %v21 = vld [vmem:[%s0 + $0x10] sm:$0xff]
  %v22 = vld [vmem:[%s0 + $0x18] sm:$0xff]
  %v23 = vld [vmem:[%s0 + $0x20] sm:$0xff]
  %v24 = vld [vmem:[%s0 + $0x28] sm:$0xff]
  %v25 = vld [vmem:[%s0 + $0x30] sm:$0xff]
  %v26 = vld [vmem:[%s0 + $0x38] sm:$0xff]
  %v31 = vrot.slane %v21, 7
  %vm32 = vcmask 1041409
  %v33 = vsel %vm32, %v31, %v19
  %vm34 = vcmask 1045509
  %v35 = vsel %vm34, %v31, %v33
  %v36 = vrot.slane %v23, 6
  %vm37 = vcmask 1042434
  %v38 = vsel %vm37, %v36, %v35
  %vm39 = vcmask 1046534
  %v40 = vsel %vm39, %v36, %v38
  %v41 = vrot.slane %v25, 5
  %vm42 = vcmask 1043459
  %v43 = vsel %vm42, %v41, %v40
  %vm44 = vcmask 1047559
  %v45 = vsel %vm44, %v41, %v43
  %46 = vrot.lane.b32.xlu0 %v45, 19
  %v47 = vpop.permute.xlu0 %46
  %vm49 = vcmask 281752
  %50 = vst.msk [vmem:[#allocation2] sm:$0xf] %vm49, %v47
  %v51 = vrot.slane %v19, 1
  %v52 = vsel %vm32, %v21, %v51
  %v53 = vsel %vm34, %v21, %v52
  %v54 = vrot.slane %v23, 7
  %v55 = vsel %vm37, %v54, %v53
  %v56 = vsel %vm39, %v54, %v55
  %v57 = vrot.slane %v25, 6
  %v58 = vsel %vm42, %v57, %v56
  %v59 = vsel %vm44, %v57, %v58
  %60 = vrot.lane.b32.xlu0 %v59, 37
  %v61 = vpop.permute.xlu0 %60
  %vm63 = vcmask 429352
  %64 = vst.msk [vmem:[#allocation2] sm:$0xf] %vm63, %v61
  %v65 = vrot.slane %v19, 2
  %v66 = vrot.slane %v21, 1
  %v67 = vsel %vm32, %v66, %v65
  %v68 = vsel %vm34, %v66, %v67
  %v69 = vsel %vm37, %v23, %v68
  %v70 = vsel %vm39, %v23, %v69
  %v71 = vrot.slane %v25, 7
  %v72 = vsel %vm42, %v71, %v70
  %v73 = vsel %vm44, %v71, %v72
  %74 = vrot.lane.b32.xlu0 %v73, 55
  %v75 = vpop.permute.xlu0 %74
  %vm77 = vcmask 576952
  %78 = vst.msk [vmem:[#allocation2] sm:$0xf] %vm77, %v75
  %v79 = vrot.slane %v19, 3
  %v80 = vrot.slane %v21, 2
  %v81 = vsel %vm32, %v80, %v79
  %v82 = vsel %vm34, %v80, %v81
  %v83 = vrot.slane %v23, 1
  %v84 = vsel %vm37, %v83, %v82
  %v85 = vsel %vm39, %v83, %v84
  %v86 = vsel %vm42, %v25, %v85
  %v87 = vsel %vm44, %v25, %v86
  %88 = vrot.lane.b32.xlu0 %v87, 73
  %v89 = vpop.permute.xlu0 %88
  %vm91 = vcmask 724552
  %92 = vst.msk [vmem:[#allocation2] sm:$0xf] %vm91, %v89
  %v93 = vcombine.high %v19, %v19
  %v94 = vcombine.high %v21, %v21
  %v95 = vcombine.high %v23, %v23
  %v96 = vcombine.high %v25, %v25
  %v97 = vrot.slane %v94, 7
  %v98 = vsel %vm32, %v97, %v93
  %v99 = vsel %vm34, %v97, %v98
  %v100 = vrot.slane %v95, 6
  %v101 = vsel %vm37, %v100, %v99
  %v102 = vsel %vm39, %v100, %v101
  %v103 = vrot.slane %v96, 5
  %v104 = vsel %vm42, %v103, %v102
  %v105 = vsel %vm44, %v103, %v104
  %106 = vrot.lane.b32.xlu0 %v105, 91
  %v107 = vpop.permute.xlu0 %106
  %vm109 = vcmask 872152
  %110 = vst.msk [vmem:[#allocation2] sm:$0xf] %vm109, %v107
  %v111 = vrot.slane %v93, 1
  %v112 = vsel %vm32, %v94, %v111
  %v113 = vsel %vm34, %v94, %v112
  %v114 = vrot.slane %v95, 7
  %v115 = vsel %vm37, %v114, %v113
  %v116 = vsel %vm39, %v114, %v115
  %v117 = vrot.slane %v96, 6
  %v118 = vsel %vm42, %v117, %v116
  %v119 = vsel %vm44, %v117, %v118
  %120 = vrot.lane.b32.xlu0 %v119, 109
  %v121 = vpop.permute.xlu0 %120
  %vm123 = vcmask 1019752
  %124 = vst.msk [vmem:[#allocation2] sm:$0xf] %vm123, %v121
  %v125 = vrot.slane %v93, 2
  %v126 = vrot.slane %v94, 1
  %v127 = vsel %vm32, %v126, %v125
  %v128 = vsel %vm34, %v126, %v127
  %v129 = vsel %vm37, %v95, %v128
  %v130 = vsel %vm39, %v95, %v129
  %v131 = vrot.slane %v96, 7
  %v132 = vsel %vm42, %v131, %v130
  %v133 = vsel %vm44, %v131, %v132
  %134 = vrot.lane.b32.xlu0 %v133, 127
  %v135 = vpop.permute.xlu0 %134
  %v136 = vrot.slane %v135, 4
  %vm137 = vcmask 1039360
  %v138 = vsel %vm137, %v136, %v135
  %vm140 = vcmask 1044472
  %vm141 = vcmask 121860
  %vm142 = vmor %vm141, %vm140
  %143 = vst.msk [vmem:[#allocation2] sm:$0xff] %vm142, %v138
  %v144 = vrot.slane %v93, 3
  %v145 = vrot.slane %v94, 2
  %v146 = vsel %vm32, %v145, %v144
  %v147 = vsel %vm34, %v145, %v146
  %v148 = vrot.slane %v95, 1
  %v149 = vsel %vm37, %v148, %v147
  %v150 = vsel %vm39, %v148, %v149
  %v151 = vsel %vm42, %v96, %v150
  %v152 = vsel %vm44, %v96, %v151
  %153 = vrot.lane.b32.xlu0 %v152, 17
  %v154 = vpop.permute.xlu0 %153
  %vm156 = vcmask 265352
  %157 = vst.msk [vmem:[#allocation2 + $0x4] sm:$0xf] %vm156, %v154
  %v162 = vrot.slane %v22, 7
  %v163 = vsel %vm32, %v162, %v20
  %v164 = vsel %vm34, %v162, %v163
  %v165 = vrot.slane %v24, 6
  %v166 = vsel %vm37, %v165, %v164
  %v167 = vsel %vm39, %v165, %v166
  %v168 = vrot.slane %v26, 5
  %v169 = vsel %vm42, %v168, %v167
  %v170 = vsel %vm44, %v168, %v169
  %171 = vrot.lane.b32.xlu0 %v170, 35
  %v172 = vpop.permute.xlu0 %171
  %vm174 = vcmask 412952
  %175 = vst.msk [vmem:[#allocation2 + $0x4] sm:$0xf] %vm174, %v172
  %v176 = vrot.slane %v20, 1
  %v177 = vsel %vm32, %v22, %v176
  %v178 = vsel %vm34, %v22, %v177
  %v179 = vrot.slane %v24, 7
  %v180 = vsel %vm37, %v179, %v178
  %v181 = vsel %vm39, %v179, %v180
  %v182 = vrot.slane %v26, 6
  %v183 = vsel %vm42, %v182, %v181
  %v184 = vsel %vm44, %v182, %v183
  %185 = vrot.lane.b32.xlu0 %v184, 53
  %v186 = vpop.permute.xlu0 %185
  %vm188 = vcmask 560552
  %189 = vst.msk [vmem:[#allocation2 + $0x4] sm:$0xf] %vm188, %v186
  %v190 = vrot.slane %v20, 2
  %v191 = vrot.slane %v22, 1
  %v192 = vsel %vm32, %v191, %v190
  %v193 = vsel %vm34, %v191, %v192
  %v194 = vsel %vm37, %v24, %v193
  %v195 = vsel %vm39, %v24, %v194
  %v196 = vrot.slane %v26, 7
  %v197 = vsel %vm42, %v196, %v195
  %v198 = vsel %vm44, %v196, %v197
  %199 = vrot.lane.b32.xlu0 %v198, 71
  %v200 = vpop.permute.xlu0 %199
  %vm202 = vcmask 708152
  %203 = vst.msk [vmem:[#allocation2 + $0x4] sm:$0xf] %vm202, %v200
  %v204 = vrot.slane %v20, 3
  %v205 = vrot.slane %v22, 2
  %v206 = vsel %vm32, %v205, %v204
  %v207 = vsel %vm34, %v205, %v206
  %v208 = vrot.slane %v24, 1
  %v209 = vsel %vm37, %v208, %v207
  %v210 = vsel %vm39, %v208, %v209
  %v211 = vsel %vm42, %v26, %v210
  %v212 = vsel %vm44, %v26, %v211
  %213 = vrot.lane.b32.xlu0 %v212, 89
  %v214 = vpop.permute.xlu0 %213
  %vm216 = vcmask 855752
  %217 = vst.msk [vmem:[#allocation2 + $0x4] sm:$0xf] %vm216, %v214
  %v218 = vcombine.high %v20, %v20
  %v219 = vcombine.high %v22, %v22
  %v220 = vcombine.high %v24, %v24
  %v221 = vcombine.high %v26, %v26
  %v222 = vrot.slane %v219, 7
  %v223 = vsel %vm32, %v222, %v218
  %v224 = vsel %vm34, %v222, %v223
  %v225 = vrot.slane %v220, 6
  %v226 = vsel %vm37, %v225, %v224
  %v227 = vsel %vm39, %v225, %v226
  %v228 = vrot.slane %v221, 5
  %v229 = vsel %vm42, %v228, %v227
  %v230 = vsel %vm44, %v228, %v229
  %231 = vrot.lane.b32.xlu0 %v230, 107
  %v232 = vpop.permute.xlu0 %231
  %vm234 = vcmask 1003352
  %235 = vst.msk [vmem:[#allocation2 + $0x4] sm:$0xf] %vm234, %v232
  %v236 = vrot.slane %v218, 1
  %v237 = vsel %vm32, %v219, %v236
  %v238 = vsel %vm34, %v219, %v237
  %v239 = vrot.slane %v220, 7
  %v240 = vsel %vm37, %v239, %v238
  %v241 = vsel %vm39, %v239, %v240
  %v242 = vrot.slane %v221, 6
  %v243 = vsel %vm42, %v242, %v241
  %v244 = vsel %vm44, %v242, %v243
  %245 = vrot.lane.b32.xlu0 %v244, 125
  %v246 = vpop.permute.xlu0 %245
  %v247 = vrot.slane %v246, 4
  %vm248 = vcmask 1022976
  %v249 = vsel %vm248, %v247, %v246
  %vm251 = vcmask 1044456
  %vm252 = vcmask 105476
  %vm253 = vmor %vm252, %vm251
  %254 = vst.msk [vmem:[#allocation2 + $0x4] sm:$0xff] %vm253, %v249
  %v255 = vrot.slane %v218, 2
  %v256 = vrot.slane %v219, 1
  %v257 = vsel %vm32, %v256, %v255
  %v258 = vsel %vm34, %v256, %v257
  %v259 = vsel %vm37, %v220, %v258
  %v260 = vsel %vm39, %v220, %v259
  %v261 = vrot.slane %v221, 7
  %v262 = vsel %vm42, %v261, %v260
  %v263 = vsel %vm44, %v261, %v262
  %264 = vrot.lane.b32.xlu0 %v263, 15
  %v265 = vpop.permute.xlu0 %264
  %vm267 = vcmask 248952
  %268 = vst.msk [vmem:[#allocation2 + $0x8] sm:$0xf] %vm267, %v265
  %v269 = vrot.slane %v218, 3
  %v270 = vrot.slane %v219, 2
  %v271 = vsel %vm32, %v270, %v269
  %v272 = vsel %vm34, %v270, %v271
  %v273 = vrot.slane %v220, 1
  %v274 = vsel %vm37, %v273, %v272
  %v275 = vsel %vm39, %v273, %v274
  %v276 = vsel %vm42, %v221, %v275
  %v277 = vsel %vm44, %v221, %v276
  %278 = vrot.lane.b32.xlu0 %v277, 33
  %v279 = vpop.permute.xlu0 %278
  %vm281 = vcmask 396552
  %282 = vst.msk [vmem:[#allocation2 + $0x8] sm:$0xf] %vm281, %v279
  %v283 = vld [vmem:[#allocation2] sm:$0xff]
  %v284 = vld [vmem:[#allocation2 + $0x8] sm:$0xf]
  %v286 = vcombine.high %v283, %v283
  %288 = vst [vmem:[#allocation3] sm:$0xf] %v283
  %289 = vst [vmem:[#allocation3 + $0x8] sm:$0xf] %v286
  %vm290 = vcmask 257024
  %291 = vst.msk [vmem:[#allocation3 + $0x10] sm:$0xf] %vm290, %v284
  %v292 = vld [vmem:[#allocation2] sm:$0xff]
  %v293 = vld [vmem:[#allocation2 + $0x8] sm:$0xf]
  %v296 = vcombine.low %v292, %v292
  %v297 = vcombine.low %v293, %v293
  %298 = vrot.lane.b32.xlu0 %v296, 127
  %v299 = vpop.permute.xlu0 %298
  %300 = vrot.lane.b32.xlu0 %v292, 127
  %v301 = vpop.permute.xlu0 %300
  %302 = vrot.lane.b32.xlu0 %v297, 127
  %v303 = vpop.permute.xlu0 %302
  %v304 = vsel %vm137, %v299, %v301
  %v305 = vsel %vm137, %v301, %v303
  %309 = vst [vmem:[#allocation3] sm:$0xf0] %v304
  %310 = vst [vmem:[#allocation3 + $0x8] sm:$0xf0] %v305
  %vm311 = vcmask 261124
  %312 = vst.msk [vmem:[#allocation3 + $0x10] sm:$0xf0] %vm311, %v303
  %v313 = vld [vmem:[#allocation2] sm:$0xff]
  %v314 = vld [vmem:[#allocation2 + $0x8] sm:$0xf]
  %v317 = vcombine.high %v313, %v313
  %318 = vrot.lane.b32.xlu0 %v313, 126
  %v319 = vpop.permute.xlu0 %318
  %320 = vrot.lane.b32.xlu0 %v317, 126
  %v321 = vpop.permute.xlu0 %320
  %322 = vrot.lane.b32.xlu0 %v314, 126
  %v323 = vpop.permute.xlu0 %322
  %vm324 = vcmask 1031168
  %v325 = vsel %vm324, %v319, %v321
  %v326 = vsel %vm324, %v321, %v323
  %330 = vst [vmem:[#allocation3 + $0x18] sm:$0xf] %v325
  %331 = vst [vmem:[#allocation3 + $0x20] sm:$0xf] %v326
  %332 = vst.msk [vmem:[#allocation3 + $0x28] sm:$0xf] %vm290, %v323
  %v333 = vld [vmem:[#allocation2] sm:$0xff]
  %v334 = vld [vmem:[#allocation2 + $0x8] sm:$0xf]
  %v337 = vcombine.low %v333, %v333
  %v338 = vcombine.low %v334, %v334
  %339 = vrot.lane.b32.xlu0 %v337, 110
  %v340 = vpop.permute.xlu0 %339
  %341 = vrot.lane.b32.xlu0 %v333, 110
  %v342 = vpop.permute.xlu0 %341
  %343 = vrot.lane.b32.xlu0 %v338, 110
  %v344 = vpop.permute.xlu0 %343
  %vm345 = vcmask 900096
  %v346 = vsel %vm345, %v340, %v342
  %v347 = vsel %vm345, %v342, %v344
  %351 = vst [vmem:[#allocation3 + $0x18] sm:$0xf0] %v346
  %352 = vst [vmem:[#allocation3 + $0x20] sm:$0xf0] %v347
  %353 = vst.msk [vmem:[#allocation3 + $0x28] sm:$0xf0] %vm311, %v344
  %v354 = vld [vmem:[#allocation2] sm:$0xff]
  %v355 = vld [vmem:[#allocation2 + $0x8] sm:$0xf]
  %v358 = vcombine.high %v354, %v354
  %359 = vrot.lane.b32.xlu0 %v354, 109
  %v360 = vpop.permute.xlu0 %359
  %361 = vrot.lane.b32.xlu0 %v358, 109
  %v362 = vpop.permute.xlu0 %361
  %363 = vrot.lane.b32.xlu0 %v355, 109
  %v364 = vpop.permute.xlu0 %363
  %vm365 = vcmask 891904
  %v366 = vsel %vm365, %v360, %v362
  %v367 = vsel %vm365, %v362, %v364
  %371 = vst [vmem:[#allocation3 + $0x30] sm:$0xf] %v366
  %372 = vst [vmem:[#allocation3 + $0x38] sm:$0xf] %v367
  %373 = vst.msk [vmem:[#allocation3 + $0x40] sm:$0xf] %vm290, %v364
  %v374 = vld [vmem:[#allocation2] sm:$0xff]
  %v375 = vld [vmem:[#allocation2 + $0x8] sm:$0xf]
  %v378 = vcombine.low %v374, %v374
  %v379 = vcombine.low %v375, %v375
  %380 = vrot.lane.b32.xlu0 %v378, 108
  %v381 = vpop.permute.xlu0 %380
  %382 = vrot.lane.b32.xlu0 %v374, 108
  %v383 = vpop.permute.xlu0 %382
  %384 = vrot.lane.b32.xlu0 %v379, 108
  %v385 = vpop.permute.xlu0 %384
  %vm386 = vcmask 883712
  %v387 = vsel %vm386, %v381, %v383
  %v388 = vsel %vm386, %v383, %v385
  %392 = vst [vmem:[#allocation3 + $0x30] sm:$0xf0] %v387
  %393 = vst [vmem:[#allocation3 + $0x38] sm:$0xf0] %v388
  %394 = vst.msk [vmem:[#allocation3 + $0x40] sm:$0xf0] %vm311, %v385
  %v395 = vld [vmem:[#allocation2] sm:$0xff]
  %v396 = vld [vmem:[#allocation2 + $0x8] sm:$0xf]
  %v399 = vcombine.high %v395, %v395
  %400 = vrot.lane.b32.xlu0 %v395, 92
  %v401 = vpop.permute.xlu0 %400
  %402 = vrot.lane.b32.xlu0 %v399, 92
  %v403 = vpop.permute.xlu0 %402
  %404 = vrot.lane.b32.xlu0 %v396, 92
  %v405 = vpop.permute.xlu0 %404
  %vm406 = vcmask 752640
  %v407 = vsel %vm406, %v401, %v403
  %v408 = vsel %vm406, %v403, %v405
  %412 = vst [vmem:[#allocation3 + $0x48] sm:$0xf] %v407
  %413 = vst [vmem:[#allocation3 + $0x50] sm:$0xf] %v408
  %414 = vst.msk [vmem:[#allocation3 + $0x58] sm:$0xf] %vm290, %v405
  %v415 = vld [vmem:[#allocation2] sm:$0xff]
  %v416 = vld [vmem:[#allocation2 + $0x8] sm:$0xf]
  %v419 = vcombine.low %v415, %v415
  %v420 = vcombine.low %v416, %v416
  %421 = vrot.lane.b32.xlu0 %v419, 91
  %v422 = vpop.permute.xlu0 %421
  %423 = vrot.lane.b32.xlu0 %v415, 91
  %v424 = vpop.permute.xlu0 %423
  %425 = vrot.lane.b32.xlu0 %v420, 91
  %v426 = vpop.permute.xlu0 %425
  %vm427 = vcmask 744448
  %v428 = vsel %vm427, %v422, %v424
  %v429 = vsel %vm427, %v424, %v426
  %433 = vst [vmem:[#allocation3 + $0x48] sm:$0xf0] %v428
  %434 = vst [vmem:[#allocation3 + $0x50] sm:$0xf0] %v429
  %435 = vst.msk [vmem:[#allocation3 + $0x58] sm:$0xf0] %vm311, %v426
  %v436 = vld [vmem:[#allocation2] sm:$0xff]
  %v437 = vld [vmem:[#allocation2 + $0x8] sm:$0xf]
  %v440 = vcombine.high %v436, %v436
  %441 = vrot.lane.b32.xlu0 %v436, 90
  %v442 = vpop.permute.xlu0 %441
  %443 = vrot.lane.b32.xlu0 %v440, 90
  %v444 = vpop.permute.xlu0 %443
  %445 = vrot.lane.b32.xlu0 %v437, 90
  %v446 = vpop.permute.xlu0 %445
  %vm447 = vcmask 736256
  %v448 = vsel %vm447, %v442, %v444
  %v449 = vsel %vm447, %v444, %v446
  %453 = vst [vmem:[#allocation3 + $0x60] sm:$0xf] %v448
  %454 = vst [vmem:[#allocation3 + $0x68] sm:$0xf] %v449
  %455 = vst.msk [vmem:[#allocation3 + $0x70] sm:$0xf] %vm290, %v446
  %v456 = vld [vmem:[%s1] sm:$0xff]
  %v457 = vld [vmem:[%s1 + $0x8] sm:$0xff]
  %v458 = vld [vmem:[#allocation3] sm:$0xff]
  %v459 = vld [vmem:[#allocation3 + $0x8] sm:$0xff]
  %v460 = vld [vmem:[#allocation3 + $0x10] sm:$0xff]
  %v461 = vld [vmem:[#allocation3 + $0x18] sm:$0xff]
  %v462 = vld [vmem:[#allocation3 + $0x20] sm:$0xff]
  %v463 = vld [vmem:[#allocation3 + $0x28] sm:$0xff]
  %v464 = vld [vmem:[#allocation3 + $0x30] sm:$0xff]
  %v465 = vld [vmem:[#allocation3 + $0x38] sm:$0xff]
  %v466 = vld [vmem:[#allocation3 + $0x40] sm:$0xff]
  %v467 = vld [vmem:[#allocation3 + $0x48] sm:$0xff]
  %v468 = vld [vmem:[#allocation3 + $0x50] sm:$0xff]
  %v469 = vld [vmem:[#allocation3 + $0x58] sm:$0xff]
  %v470 = vld [vmem:[#allocation3 + $0x60] sm:$0xf]
  %v471 = vld [vmem:[#allocation3 + $0x68] sm:$0xf]
  %v472 = vld [vmem:[#allocation3 + $0x70] sm:$0xf]
  %v473 = vld [vmem:[%s2] sm:$0xff]
  %v474 = vld [vmem:[%s2 + $0x8] sm:$0xff]
  %476 = vset.pattern.permute.xlu0 0
  %477 = vperm.xlu0 %476, %v473
  %v478 = vpop.permute.xlu0 %477
  %481 = vset.pattern.permute.xlu0 0
  %482 = vperm.xlu0 %481, %v474
  %v483 = vpop.permute.xlu0 %482
  %vm485 = vcmask 293888
  %v487 = vsel %vm485, %v456, 0
  %v490 = vsel %vm485, %v457, 0
  %vm492 = vcmask 1043456
  %v494 = vsel %vm492, %v470, 0
  %v497 = vsel %vm492, %v471, 0
  %v500 = vsel %vm492, %v472, 0
  %502 = vmatprep.subr.mxu0 %v459
  %503 = vmatpush1.msra.mxu0 %v458
  %504 = vmatprep.subr.mxu0 %v462
  %505 = vmatpush1.msra.mxu0 %v461
  %506 = vmatprep.subr.mxu0 %v465
  %507 = vmatpush1.msra.mxu0 %v464
  %508 = vmatprep.subr.mxu0 %v468
  %509 = vmatpush1.msra.mxu0 %v467
  %510 = vmatprep.subr.mxu0 %v497
  %511 = vmatpush1.msra.mxu0 %v494
  %512 = vmatprep.subr.mxu0 0.0
  %513 = vmatpush1.msra.mxu0 0.0
  %514 = vmatprep.subr.mxu0 0.0
  %515 = vmatpush1.msra.mxu0 0.0
  %516 = vmatprep.subr.mxu0 0.0
  %517 = vmatpush1.msra.mxu0 0.0
  %518 = vmatprep.subr.mxu0 0.0
  %519 = vmatpush1.msra.mxu0 0.0
  %520 = vmatprep.subr.mxu0 0.0
  %521 = vmatpush1.msra.mxu0 0.0
  %522 = vmatprep.subr.mxu0 0.0
  %523 = vmatpush1.msra.mxu0 0.0
  %524 = vmatprep.subr.mxu0 0.0
  %525 = vmatpush1.msra.mxu0 0.0
  %526 = vmatprep.subr.mxu0 0.0
  %527 = vmatpush1.msra.mxu0 0.0
  %528 = vmatprep.subr.mxu0 0.0
  %529 = vmatpush1.msra.mxu0 0.0
  %530 = vmatprep.subr.mxu0 0.0
  %531 = vmatpush1.msra.mxu0 0.0
  %532 = vmatprep.subr.mxu0 0.0
  %533 = vmatpush1.msra.mxu0 0.0
  %534 = vmatprep.subr.mxu0 0.0
  %535 = vmatpush1.msra.mxu0 0.0
  %536 = vmatprep.subr.mxu0 0.0
  %537 = vmatpush1.msra.mxu0 0.0
  %538 = vmatprep.subr.mxu0 0.0
  %539 = vmatpush1.msra.mxu0 0.0
  %540 = vmatprep.subr.mxu0 0.0
  %541 = vmatpush1.msra.mxu0 0.0
  %542 = vmatprep.subr.mxu0 0.0
  %543 = vmatpush1.msra.mxu0 0.0
  %544 = vmatprep.subr.mxu0 0.0
  %545 = vmatpush1.msra.mxu0 0.0
  %546 = vmatprep.subr.mxu0 0.0
  %547 = vmatpush1.msra.mxu0 0.0
  %548 = vmatprep.subr.mxu0 0.0
  %549 = vmatpush1.msra.mxu0 0.0
  %550 = vmatprep.subr.mxu0 0.0
  %551 = vmatpush1.msra.mxu0 0.0
  %552 = vmatprep.subr.mxu0 0.0
  %553 = vmatpush1.msra.mxu0 0.0
  %554 = vmatprep.subr.mxu0 0.0
  %555 = vmatpush1.msra.mxu0 0.0
  %556 = vmatprep.subr.mxu0 0.0
  %557 = vmatpush1.msra.mxu0 0.0
  %558 = vmatprep.subr.mxu0 0.0
  %559 = vmatpush1.msra.mxu0 0.0
  %560 = vmatprep.subr.mxu0 0.0
  %561 = vmatpush1.msra.mxu0 0.0
  %562 = vmatprep.subr.mxu0 0.0
  %563 = vmatpush1.msra.mxu0 0.0
  %564 = vmatprep.subr.mxu0 0.0
  %565 = vmatpush1.msra.mxu0 0.0
  %566 = vmatprep.mubr.f32.mxu0 0.0
  %567 = vmatmul.mubr.f32.gmra.mrb[0].mxu0 %v487
  %v568 = vpop.f32.mrb[0].mxu0
  %v569 = vadd.f32 %v478, %v568
  %v570 = vpop.f32.mrb[0].mxu0
  %v571 = vadd.f32 %v478, %v570
  %572 = vmatprep.mubr.f32.mxu0 0.0
  %573 = vmatmul.mubr.f32.gmra.mrb[0].mxu0 %v490
  %v574 = vpop.f32.mrb[0].mxu0
  %v575 = vadd.f32 %v483, %v574
  %v576 = vpop.f32.mrb[0].mxu0
  %v577 = vadd.f32 %v483, %v576
  %578 = vdwg.mxu0
  %579 = vmatprep.subr.mxu0 0.0
  %580 = vmatpush1.msra.mxu0 %v460
  %581 = vmatprep.subr.mxu0 0.0
  %582 = vmatpush1.msra.mxu0 %v463
  %583 = vmatprep.subr.mxu0 0.0
  %584 = vmatpush1.msra.mxu0 %v466
  %585 = vmatprep.subr.mxu0 0.0
  %586 = vmatpush1.msra.mxu0 %v469
  %587 = vmatprep.subr.mxu0 0.0
  %588 = vmatpush1.msra.mxu0 %v500
  %589 = vmatprep.subr.mxu0 0.0
  %590 = vmatpush1.msra.mxu0 0.0
  %591 = vmatprep.subr.mxu0 0.0
  %592 = vmatpush1.msra.mxu0 0.0
  %593 = vmatprep.subr.mxu0 0.0
  %594 = vmatpush1.msra.mxu0 0.0
  %595 = vmatprep.subr.mxu0 0.0
  %596 = vmatpush1.msra.mxu0 0.0
  %597 = vmatprep.subr.mxu0 0.0
  %598 = vmatpush1.msra.mxu0 0.0
  %599 = vmatprep.subr.mxu0 0.0
  %600 = vmatpush1.msra.mxu0 0.0
  %601 = vmatprep.subr.mxu0 0.0
  %602 = vmatpush1.msra.mxu0 0.0
  %603 = vmatprep.subr.mxu0 0.0
  %604 = vmatpush1.msra.mxu0 0.0
  %605 = vmatprep.subr.mxu0 0.0
  %606 = vmatpush1.msra.mxu0 0.0
  %607 = vmatprep.subr.mxu0 0.0
  %608 = vmatpush1.msra.mxu0 0.0
  %609 = vmatprep.subr.mxu0 0.0
  %610 = vmatpush1.msra.mxu0 0.0
  %611 = vmatprep.subr.mxu0 0.0
  %612 = vmatpush1.msra.mxu0 0.0
  %613 = vmatprep.subr.mxu0 0.0
  %614 = vmatpush1.msra.mxu0 0.0
  %615 = vmatprep.subr.mxu0 0.0
  %616 = vmatpush1.msra.mxu0 0.0
  %617 = vmatprep.subr.mxu0 0.0
  %618 = vmatpush1.msra.mxu0 0.0
  %619 = vmatprep.subr.mxu0 0.0
  %620 = vmatpush1.msra.mxu0 0.0
  %621 = vmatprep.subr.mxu0 0.0
  %622 = vmatpush1.msra.mxu0 0.0
  %623 = vmatprep.subr.mxu0 0.0
  %624 = vmatpush1.msra.mxu0 0.0
  %625 = vmatprep.subr.mxu0 0.0
  %626 = vmatpush1.msra.mxu0 0.0
  %627 = vmatprep.subr.mxu0 0.0
  %628 = vmatpush1.msra.mxu0 0.0
  %629 = vmatprep.subr.mxu0 0.0
  %630 = vmatpush1.msra.mxu0 0.0
  %631 = vmatprep.subr.mxu0 0.0
  %632 = vmatpush1.msra.mxu0 0.0
  %633 = vmatprep.subr.mxu0 0.0
  %634 = vmatpush1.msra.mxu0 0.0
  %635 = vmatprep.subr.mxu0 0.0
  %636 = vmatpush1.msra.mxu0 0.0
  %637 = vmatprep.subr.mxu0 0.0
  %638 = vmatpush1.msra.mxu0 0.0
  %639 = vmatprep.subr.mxu0 0.0
  %640 = vmatpush1.msra.mxu0 0.0
  %641 = vmatprep.subr.mxu0 0.0
  %642 = vmatpush1.msra.mxu0 0.0
  %643 = vmatprep.mubr.f32.mxu0 0.0
  %644 = vmatmul.mubr.f32.gmra.mrb[0].mxu0 %v487
  %v645 = vpop.f32.mrb[0].mxu0
  %v646 = vadd.f32 %v478, %v645
  %v647 = vpop.f32.mrb[0].mxu0
  %648 = vmatprep.mubr.f32.mxu0 0.0
  %649 = vmatmul.mubr.f32.gmra.mrb[0].mxu0 %v490
  %v650 = vpop.f32.mrb[0].mxu0
  %v651 = vadd.f32 %v483, %v650
  %v652 = vpop.f32.mrb[0].mxu0
  %653 = vdwg.mxu0
  %v654 = vld [vmem:[%s3] sm:$0x7]
  %v656 = vlaneseq
  %v657 = vshrl.u32 %v656, 7
  %v658 = vsub.s32 0, %v657
  %v659 = vrot.slane %v654, %v658
  %v660 = vlaneseq
  %v661 = vshrl.u32 %v660, 7
  %v662 = vsub.s32 1, %v661
  %v663 = vrot.slane %v654, %v662
  %v664 = vlaneseq
  %v665 = vshrl.u32 %v664, 7
  %v666 = vsub.s32 2, %v665
  %v667 = vrot.slane %v654, %v666
  %v671 = vmul.f32 %v569, %v659
  %v672 = vmul.f32 %v571, %v663
  %v673 = vmul.f32 %v646, %v667
  %v674 = vmul.f32 %v575, %v659
  %v675 = vmul.f32 %v577, %v663
  %v676 = vmul.f32 %v651, %v667
  %vm677 = vcmask 130048
  %678 = vst.msk [vmem:[%s4] sm:$0xff] %vm677, %v671
  %679 = vst.msk [vmem:[%s4 + $0x10] sm:$0xff] %vm677, %v674
  %682 = vrot.lane.b32.xlu0 %v671, 126
  %v683 = vpop.permute.xlu0 %682
  %684 = vrot.lane.b32.xlu0 %v674, 126
  %v685 = vpop.permute.xlu0 %684
  %vm688 = vcmask 261248
  %689 = vst.msk [vmem:[%s4] sm:$0xff] %vm688, %v683
  %690 = vst.msk [vmem:[%s4 + $0x10] sm:$0xff] %vm688, %v685
  %691 = vrot.lane.b32.xlu0 %v671, 124
  %v692 = vpop.permute.xlu0 %691
  %693 = vrot.lane.b32.xlu0 %v674, 124
  %v694 = vpop.permute.xlu0 %693
  %vm697 = vcmask 392448
  %698 = vst.msk [vmem:[%s4] sm:$0xff] %vm697, %v692
  %699 = vst.msk [vmem:[%s4 + $0x10] sm:$0xff] %vm697, %v694
  %700 = vrot.lane.b32.xlu0 %v671, 122
  %v701 = vpop.permute.xlu0 %700
  %702 = vrot.lane.b32.xlu0 %v674, 122
  %v703 = vpop.permute.xlu0 %702
  %vm706 = vcmask 523648
  %707 = vst.msk [vmem:[%s4] sm:$0xff] %vm706, %v701
  %708 = vst.msk [vmem:[%s4 + $0x10] sm:$0xff] %vm706, %v703
  %709 = vrot.lane.b32.xlu0 %v671, 120
  %v710 = vpop.permute.xlu0 %709
  %711 = vrot.lane.b32.xlu0 %v674, 120
  %v712 = vpop.permute.xlu0 %711
  %vm715 = vcmask 654848
  %716 = vst.msk [vmem:[%s4] sm:$0xff] %vm715, %v710
  %717 = vst.msk [vmem:[%s4 + $0x10] sm:$0xff] %vm715, %v712
  %718 = vrot.lane.b32.xlu0 %v671, 118
  %v719 = vpop.permute.xlu0 %718
  %720 = vrot.lane.b32.xlu0 %v674, 118
  %v721 = vpop.permute.xlu0 %720
  %vm724 = vcmask 786048
  %725 = vst.msk [vmem:[%s4] sm:$0xff] %vm724, %v719
  %726 = vst.msk [vmem:[%s4 + $0x10] sm:$0xff] %vm724, %v721
  %727 = vrot.lane.b32.xlu0 %v671, 116
  %v728 = vpop.permute.xlu0 %727
  %729 = vrot.lane.b32.xlu0 %v674, 116
  %v730 = vpop.permute.xlu0 %729
  %vm733 = vcmask 917248
  %734 = vst.msk [vmem:[%s4] sm:$0xff] %vm733, %v728
  %735 = vst.msk [vmem:[%s4 + $0x10] sm:$0xff] %vm733, %v730
  %738 = vrot.lane.b32.xlu0 %v671, 114
  %v739 = vpop.permute.xlu0 %738
  %740 = vrot.lane.b32.xlu0 %v672, 114
  %v741 = vpop.permute.xlu0 %740
  %742 = vrot.lane.b32.xlu0 %v674, 114
  %v743 = vpop.permute.xlu0 %742
  %744 = vrot.lane.b32.xlu0 %v675, 114
  %v745 = vpop.permute.xlu0 %744
  %vm746 = vcmask 932864
  %v747 = vsel %vm746, %v739, %v741
  %v748 = vsel %vm746, %v743, %v745
  %vm751 = vcmask 1048448
  %752 = vst.msk [vmem:[%s4] sm:$0xff] %vm751, %v747
  %753 = vst.msk [vmem:[%s4 + $0x10] sm:$0xff] %vm751, %v748
  %754 = vrot.lane.b32.xlu0 %v672, 112
  %v755 = vpop.permute.xlu0 %754
  %756 = vrot.lane.b32.xlu0 %v675, 112
  %v757 = vpop.permute.xlu0 %756
  %760 = vst.msk [vmem:[%s4 + $0x8] sm:$0xff] %vm677, %v755
  %761 = vst.msk [vmem:[%s4 + $0x18] sm:$0xff] %vm677, %v757
  %762 = vrot.lane.b32.xlu0 %v672, 110
  %v763 = vpop.permute.xlu0 %762
  %764 = vrot.lane.b32.xlu0 %v675, 110
  %v765 = vpop.permute.xlu0 %764
  %768 = vst.msk [vmem:[%s4 + $0x8] sm:$0xff] %vm688, %v763
  %769 = vst.msk [vmem:[%s4 + $0x18] sm:$0xff] %vm688, %v765
  %770 = vrot.lane.b32.xlu0 %v672, 108
  %v771 = vpop.permute.xlu0 %770
  %772 = vrot.lane.b32.xlu0 %v675, 108
  %v773 = vpop.permute.xlu0 %772
  %776 = vst.msk [vmem:[%s4 + $0x8] sm:$0xff] %vm697, %v771
  %777 = vst.msk [vmem:[%s4 + $0x18] sm:$0xff] %vm697, %v773
  %778 = vrot.lane.b32.xlu0 %v672, 106
  %v779 = vpop.permute.xlu0 %778
  %780 = vrot.lane.b32.xlu0 %v675, 106
  %v781 = vpop.permute.xlu0 %780
  %784 = vst.msk [vmem:[%s4 + $0x8] sm:$0xff] %vm706, %v779
  %785 = vst.msk [vmem:[%s4 + $0x18] sm:$0xff] %vm706, %v781
  %786 = vrot.lane.b32.xlu0 %v672, 104
  %v787 = vpop.permute.xlu0 %786
  %788 = vrot.lane.b32.xlu0 %v675, 104
  %v789 = vpop.permute.xlu0 %788
  %792 = vst.msk [vmem:[%s4 + $0x8] sm:$0xff] %vm715, %v787
  %793 = vst.msk [vmem:[%s4 + $0x18] sm:$0xff] %vm715, %v789
  %794 = vrot.lane.b32.xlu0 %v672, 102
  %v795 = vpop.permute.xlu0 %794
  %796 = vrot.lane.b32.xlu0 %v675, 102
  %v797 = vpop.permute.xlu0 %796
  %800 = vst.msk [vmem:[%s4 + $0x8] sm:$0xff] %vm724, %v795
  %801 = vst.msk [vmem:[%s4 + $0x18] sm:$0xff] %vm724, %v797
  %804 = vrot.lane.b32.xlu0 %v672, 100
  %v805 = vpop.permute.xlu0 %804
  %806 = vrot.lane.b32.xlu0 %v673, 100
  %v807 = vpop.permute.xlu0 %806
  %808 = vrot.lane.b32.xlu0 %v675, 100
  %v809 = vpop.permute.xlu0 %808
  %810 = vrot.lane.b32.xlu0 %v676, 100
  %v811 = vpop.permute.xlu0 %810
  %vm812 = vcmask 818176
  %v813 = vsel %vm812, %v805, %v807
  %v814 = vsel %vm812, %v809, %v811
  %817 = vst.msk [vmem:[%s4 + $0x8] sm:$0xff] %vm733, %v813
  %818 = vst.msk [vmem:[%s4 + $0x18] sm:$0xff] %vm733, %v814
  %819 = vrot.lane.b32.xlu0 %v673, 98
  %v820 = vpop.permute.xlu0 %819
  %821 = vrot.lane.b32.xlu0 %v676, 98
  %v822 = vpop.permute.xlu0 %821
  %825 = vst.msk [vmem:[%s4 + $0x8] sm:$0xff] %vm751, %v820
  %826 = vst.msk [vmem:[%s4 + $0x18] sm:$0xff] %vm751, %v822
  %s827 = scalar_lea.vmem %s0, 64
  %v828 = vld [vmem:[%s827] sm:$0xff]
  %v829 = vld [vmem:[%s827 + $0x8] sm:$0xff]
  %v830 = vld [vmem:[%s827 + $0x10] sm:$0xff]
  %v831 = vld [vmem:[%s827 + $0x18] sm:$0xff]
  %v832 = vld [vmem:[%s827 + $0x20] sm:$0xff]
  %v833 = vld [vmem:[%s827 + $0x28] sm:$0xff]
  %v834 = vld [vmem:[%s827 + $0x30] sm:$0xff]
  %v835 = vld [vmem:[%s827 + $0x38] sm:$0xff]
  %v840 = vrot.slane %v830, 7
  %v841 = vsel %vm32, %v840, %v828
  %v842 = vsel %vm34, %v840, %v841
  %v843 = vrot.slane %v832, 6
  %v844 = vsel %vm37, %v843, %v842
  %v845 = vsel %vm39, %v843, %v844
  %v846 = vrot.slane %v834, 5
  %v847 = vsel %vm42, %v846, %v845
  %v848 = vsel %vm44, %v846, %v847
  %849 = vrot.lane.b32.xlu0 %v848, 19
  %v850 = vpop.permute.xlu0 %849
  %852 = vst.msk [vmem:[#allocation2] sm:$0xf] %vm49, %v850
  %v853 = vrot.slane %v828, 1
  %v854 = vsel %vm32, %v830, %v853
  %v855 = vsel %vm34, %v830, %v854
  %v856 = vrot.slane %v832, 7
  %v857 = vsel %vm37, %v856, %v855
  %v858 = vsel %vm39, %v856, %v857
  %v859 = vrot.slane %v834, 6
  %v860 = vsel %vm42, %v859, %v858
  %v861 = vsel %vm44, %v859, %v860
  %862 = vrot.lane.b32.xlu0 %v861, 37
  %v863 = vpop.permute.xlu0 %862
  %865 = vst.msk [vmem:[#allocation2] sm:$0xf] %vm63, %v863
  %v866 = vrot.slane %v828, 2
  %v867 = vrot.slane %v830, 1
  %v868 = vsel %vm32, %v867, %v866
  %v869 = vsel %vm34, %v867, %v868
  %v870 = vsel %vm37, %v832, %v869
  %v871 = vsel %vm39, %v832, %v870
  %v872 = vrot.slane %v834, 7
  %v873 = vsel %vm42, %v872, %v871
  %v874 = vsel %vm44, %v872, %v873
  %875 = vrot.lane.b32.xlu0 %v874, 55
  %v876 = vpop.permute.xlu0 %875
  %878 = vst.msk [vmem:[#allocation2] sm:$0xf] %vm77, %v876
  %v879 = vrot.slane %v828, 3
  %v880 = vrot.slane %v830, 2
  %v881 = vsel %vm32, %v880, %v879
  %v882 = vsel %vm34, %v880, %v881
  %v883 = vrot.slane %v832, 1
  %v884 = vsel %vm37, %v883, %v882
  %v885 = vsel %vm39, %v883, %v884
  %v886 = vsel %vm42, %v834, %v885
  %v887 = vsel %vm44, %v834, %v886
  %888 = vrot.lane.b32.xlu0 %v887, 73
  %v889 = vpop.permute.xlu0 %888
  %891 = vst.msk [vmem:[#allocation2] sm:$0xf] %vm91, %v889
  %v892 = vcombine.high %v828, %v828
  %v893 = vcombine.high %v830, %v830
  %v894 = vcombine.high %v832, %v832
  %v895 = vcombine.high %v834, %v834
  %v896 = vrot.slane %v893, 7
  %v897 = vsel %vm32, %v896, %v892
  %v898 = vsel %vm34, %v896, %v897
  %v899 = vrot.slane %v894, 6
  %v900 = vsel %vm37, %v899, %v898
  %v901 = vsel %vm39, %v899, %v900
  %v902 = vrot.slane %v895, 5
  %v903 = vsel %vm42, %v902, %v901
  %v904 = vsel %vm44, %v902, %v903
  %905 = vrot.lane.b32.xlu0 %v904, 91
  %v906 = vpop.permute.xlu0 %905
  %908 = vst.msk [vmem:[#allocation2] sm:$0xf] %vm109, %v906
  %v909 = vrot.slane %v892, 1
  %v910 = vsel %vm32, %v893, %v909
  %v911 = vsel %vm34, %v893, %v910
  %v912 = vrot.slane %v894, 7
  %v913 = vsel %vm37, %v912, %v911
  %v914 = vsel %vm39, %v912, %v913
  %v915 = vrot.slane %v895, 6
  %v916 = vsel %vm42, %v915, %v914
  %v917 = vsel %vm44, %v915, %v916
  %918 = vrot.lane.b32.xlu0 %v917, 109
  %v919 = vpop.permute.xlu0 %918
  %921 = vst.msk [vmem:[#allocation2] sm:$0xf] %vm123, %v919
  %v922 = vrot.slane %v892, 2
  %v923 = vrot.slane %v893, 1
  %v924 = vsel %vm32, %v923, %v922
  %v925 = vsel %vm34, %v923, %v924
  %v926 = vsel %vm37, %v894, %v925
  %v927 = vsel %vm39, %v894, %v926
  %v928 = vrot.slane %v895, 7
  %v929 = vsel %vm42, %v928, %v927
  %v930 = vsel %vm44, %v928, %v929
  %931 = vrot.lane.b32.xlu0 %v930, 127
  %v932 = vpop.permute.xlu0 %931
  %v933 = vrot.slane %v932, 4
  %v934 = vsel %vm137, %v933, %v932
  %936 = vst.msk [vmem:[#allocation2] sm:$0xff] %vm142, %v934
  %v937 = vrot.slane %v892, 3
  %v938 = vrot.slane %v893, 2
  %v939 = vsel %vm32, %v938, %v937
  %v940 = vsel %vm34, %v938, %v939
  %v941 = vrot.slane %v894, 1
  %v942 = vsel %vm37, %v941, %v940
  %v943 = vsel %vm39, %v941, %v942
  %v944 = vsel %vm42, %v895, %v943
  %v945 = vsel %vm44, %v895, %v944
  %946 = vrot.lane.b32.xlu0 %v945, 17
  %v947 = vpop.permute.xlu0 %946
  %949 = vst.msk [vmem:[#allocation2 + $0x4] sm:$0xf] %vm156, %v947
  %v954 = vrot.slane %v831, 7
  %v955 = vsel %vm32, %v954, %v829
  %v956 = vsel %vm34, %v954, %v955
  %v957 = vrot.slane %v833, 6
  %v958 = vsel %vm37, %v957, %v956
  %v959 = vsel %vm39, %v957, %v958
  %v960 = vrot.slane %v835, 5
  %v961 = vsel %vm42, %v960, %v959
  %v962 = vsel %vm44, %v960, %v961
  %963 = vrot.lane.b32.xlu0 %v962, 35
  %v964 = vpop.permute.xlu0 %963
  %966 = vst.msk [vmem:[#allocation2 + $0x4] sm:$0xf] %vm174, %v964
  %v967 = vrot.slane %v829, 1
  %v968 = vsel %vm32, %v831, %v967
  %v969 = vsel %vm34, %v831, %v968
  %v970 = vrot.slane %v833, 7
  %v971 = vsel %vm37, %v970, %v969
  %v972 = vsel %vm39, %v970, %v971
  %v973 = vrot.slane %v835, 6
  %v974 = vsel %vm42, %v973, %v972
  %v975 = vsel %vm44, %v973, %v974
  %976 = vrot.lane.b32.xlu0 %v975, 53
  %v977 = vpop.permute.xlu0 %976
  %979 = vst.msk [vmem:[#allocation2 + $0x4] sm:$0xf] %vm188, %v977
  %v980 = vrot.slane %v829, 2
  %v981 = vrot.slane %v831, 1
  %v982 = vsel %vm32, %v981, %v980
  %v983 = vsel %vm34, %v981, %v982
  %v984 = vsel %vm37, %v833, %v983
  %v985 = vsel %vm39, %v833, %v984
  %v986 = vrot.slane %v835, 7
  %v987 = vsel %vm42, %v986, %v985
  %v988 = vsel %vm44, %v986, %v987
  %989 = vrot.lane.b32.xlu0 %v988, 71
  %v990 = vpop.permute.xlu0 %989
  %992 = vst.msk [vmem:[#allocation2 + $0x4] sm:$0xf] %vm202, %v990
  %v993 = vrot.slane %v829, 3
  %v994 = vrot.slane %v831, 2
  %v995 = vsel %vm32, %v994, %v993
  %v996 = vsel %vm34, %v994, %v995
  %v997 = vrot.slane %v833, 1
  %v998 = vsel %vm37, %v997, %v996
  %v999 = vsel %vm39, %v997, %v998
  %v1000 = vsel %vm42, %v835, %v999
  %v1001 = vsel %vm44, %v835, %v1000
  %1002 = vrot.lane.b32.xlu0 %v1001, 89
  %v1003 = vpop.permute.xlu0 %1002
  %1005 = vst.msk [vmem:[#allocation2 + $0x4] sm:$0xf] %vm216, %v1003
  %v1006 = vcombine.high %v829, %v829
  %v1007 = vcombine.high %v831, %v831
  %v1008 = vcombine.high %v833, %v833
  %v1009 = vcombine.high %v835, %v835
  %v1010 = vrot.slane %v1007, 7
  %v1011 = vsel %vm32, %v1010, %v1006
  %v1012 = vsel %vm34, %v1010, %v1011
  %v1013 = vrot.slane %v1008, 6
  %v1014 = vsel %vm37, %v1013, %v1012
  %v1015 = vsel %vm39, %v1013, %v1014
  %v1016 = vrot.slane %v1009, 5
  %v1017 = vsel %vm42, %v1016, %v1015
  %v1018 = vsel %vm44, %v1016, %v1017
  %1019 = vrot.lane.b32.xlu0 %v1018, 107
  %v1020 = vpop.permute.xlu0 %1019
  %1022 = vst.msk [vmem:[#allocation2 + $0x4] sm:$0xf] %vm234, %v1020
  %v1023 = vrot.slane %v1006, 1
  %v1024 = vsel %vm32, %v1007, %v1023
  %v1025 = vsel %vm34, %v1007, %v1024
  %v1026 = vrot.slane %v1008, 7
  %v1027 = vsel %vm37, %v1026, %v1025
  %v1028 = vsel %vm39, %v1026, %v1027
  %v1029 = vrot.slane %v1009, 6
  %v1030 = vsel %vm42, %v1029, %v1028
  %v1031 = vsel %vm44, %v1029, %v1030
  %1032 = vrot.lane.b32.xlu0 %v1031, 125
  %v1033 = vpop.permute.xlu0 %1032
  %v1034 = vrot.slane %v1033, 4
  %v1035 = vsel %vm248, %v1034, %v1033
  %1037 = vst.msk [vmem:[#allocation2 + $0x4] sm:$0xff] %vm253, %v1035
  %v1038 = vrot.slane %v1006, 2
  %v1039 = vrot.slane %v1007, 1
  %v1040 = vsel %vm32, %v1039, %v1038
  %v1041 = vsel %vm34, %v1039, %v1040
  %v1042 = vsel %vm37, %v1008, %v1041
  %v1043 = vsel %vm39, %v1008, %v1042
  %v1044 = vrot.slane %v1009, 7
  %v1045 = vsel %vm42, %v1044, %v1043
  %v1046 = vsel %vm44, %v1044, %v1045
  %1047 = vrot.lane.b32.xlu0 %v1046, 15
  %v1048 = vpop.permute.xlu0 %1047
  %1050 = vst.msk [vmem:[#allocation2 + $0x8] sm:$0xf] %vm267, %v1048
  %v1051 = vrot.slane %v1006, 3
  %v1052 = vrot.slane %v1007, 2
  %v1053 = vsel %vm32, %v1052, %v1051
  %v1054 = vsel %vm34, %v1052, %v1053
  %v1055 = vrot.slane %v1008, 1
  %v1056 = vsel %vm37, %v1055, %v1054
  %v1057 = vsel %vm39, %v1055, %v1056
  %v1058 = vsel %vm42, %v1009, %v1057
  %v1059 = vsel %vm44, %v1009, %v1058
  %1060 = vrot.lane.b32.xlu0 %v1059, 33
  %v1061 = vpop.permute.xlu0 %1060
  %1063 = vst.msk [vmem:[#allocation2 + $0x8] sm:$0xf] %vm281, %v1061
  %v1064 = vld [vmem:[#allocation2] sm:$0xff]
  %v1065 = vld [vmem:[#allocation2 + $0x8] sm:$0xf]
  %v1067 = vcombine.high %v1064, %v1064
  %1069 = vst [vmem:[#allocation3] sm:$0xf] %v1064
  %1070 = vst [vmem:[#allocation3 + $0x8] sm:$0xf] %v1067
  %1071 = vst.msk [vmem:[#allocation3 + $0x10] sm:$0xf] %vm290, %v1065
  %v1072 = vld [vmem:[#allocation2] sm:$0xff]
  %v1073 = vld [vmem:[#allocation2 + $0x8] sm:$0xf]
  %v1076 = vcombine.low %v1072, %v1072
  %v1077 = vcombine.low %v1073, %v1073
  %1078 = vrot.lane.b32.xlu0 %v1076, 127
  %v1079 = vpop.permute.xlu0 %1078
  %1080 = vrot.lane.b32.xlu0 %v1072, 127
  %v1081 = vpop.permute.xlu0 %1080
  %1082 = vrot.lane.b32.xlu0 %v1077, 127
  %v1083 = vpop.permute.xlu0 %1082
  %v1084 = vsel %vm137, %v1079, %v1081
  %v1085 = vsel %vm137, %v1081, %v1083
  %1089 = vst [vmem:[#allocation3] sm:$0xf0] %v1084
  %1090 = vst [vmem:[#allocation3 + $0x8] sm:$0xf0] %v1085
  %1091 = vst.msk [vmem:[#allocation3 + $0x10] sm:$0xf0] %vm311, %v1083
  %v1092 = vld [vmem:[#allocation2] sm:$0xff]
  %v1093 = vld [vmem:[#allocation2 + $0x8] sm:$0xf]
  %v1096 = vcombine.high %v1092, %v1092
  %1097 = vrot.lane.b32.xlu0 %v1092, 126
  %v1098 = vpop.permute.xlu0 %1097
  %1099 = vrot.lane.b32.xlu0 %v1096, 126
  %v1100 = vpop.permute.xlu0 %1099
  %1101 = vrot.lane.b32.xlu0 %v1093, 126
  %v1102 = vpop.permute.xlu0 %1101
  %v1103 = vsel %vm324, %v1098, %v1100
  %v1104 = vsel %vm324, %v1100, %v1102
  %1108 = vst [vmem:[#allocation3 + $0x18] sm:$0xf] %v1103
  %1109 = vst [vmem:[#allocation3 + $0x20] sm:$0xf] %v1104
  %1110 = vst.msk [vmem:[#allocation3 + $0x28] sm:$0xf] %vm290, %v1102
  %v1111 = vld [vmem:[#allocation2] sm:$0xff]
  %v1112 = vld [vmem:[#allocation2 + $0x8] sm:$0xf]
  %v1115 = vcombine.low %v1111, %v1111
  %v1116 = vcombine.low %v1112, %v1112
  %1117 = vrot.lane.b32.xlu0 %v1115, 110
  %v1118 = vpop.permute.xlu0 %1117
  %1119 = vrot.lane.b32.xlu0 %v1111, 110
  %v1120 = vpop.permute.xlu0 %1119
  %1121 = vrot.lane.b32.xlu0 %v1116, 110
  %v1122 = vpop.permute.xlu0 %1121
  %v1123 = vsel %vm345, %v1118, %v1120
  %v1124 = vsel %vm345, %v1120, %v1122
  %1128 = vst [vmem:[#allocation3 + $0x18] sm:$0xf0] %v1123
  %1129 = vst [vmem:[#allocation3 + $0x20] sm:$0xf0] %v1124
  %1130 = vst.msk [vmem:[#allocation3 + $0x28] sm:$0xf0] %vm311, %v1122
  %v1131 = vld [vmem:[#allocation2] sm:$0xff]
  %v1132 = vld [vmem:[#allocation2 + $0x8] sm:$0xf]
  %v1135 = vcombine.high %v1131, %v1131
  %1136 = vrot.lane.b32.xlu0 %v1131, 109
  %v1137 = vpop.permute.xlu0 %1136
  %1138 = vrot.lane.b32.xlu0 %v1135, 109
  %v1139 = vpop.permute.xlu0 %1138
  %1140 = vrot.lane.b32.xlu0 %v1132, 109
  %v1141 = vpop.permute.xlu0 %1140
  %v1142 = vsel %vm365, %v1137, %v1139
  %v1143 = vsel %vm365, %v1139, %v1141
  %1147 = vst [vmem:[#allocation3 + $0x30] sm:$0xf] %v1142
  %1148 = vst [vmem:[#allocation3 + $0x38] sm:$0xf] %v1143
  %1149 = vst.msk [vmem:[#allocation3 + $0x40] sm:$0xf] %vm290, %v1141
  %v1150 = vld [vmem:[#allocation2] sm:$0xff]
  %v1151 = vld [vmem:[#allocation2 + $0x8] sm:$0xf]
  %v1154 = vcombine.low %v1150, %v1150
  %v1155 = vcombine.low %v1151, %v1151
  %1156 = vrot.lane.b32.xlu0 %v1154, 108
  %v1157 = vpop.permute.xlu0 %1156
  %1158 = vrot.lane.b32.xlu0 %v1150, 108
  %v1159 = vpop.permute.xlu0 %1158
  %1160 = vrot.lane.b32.xlu0 %v1155, 108
  %v1161 = vpop.permute.xlu0 %1160
  %v1162 = vsel %vm386, %v1157, %v1159
  %v1163 = vsel %vm386, %v1159, %v1161
  %1167 = vst [vmem:[#allocation3 + $0x30] sm:$0xf0] %v1162
  %1168 = vst [vmem:[#allocation3 + $0x38] sm:$0xf0] %v1163
  %1169 = vst.msk [vmem:[#allocation3 + $0x40] sm:$0xf0] %vm311, %v1161
  %v1170 = vld [vmem:[#allocation2] sm:$0xff]
  %v1171 = vld [vmem:[#allocation2 + $0x8] sm:$0xf]
  %v1174 = vcombine.high %v1170, %v1170
  %1175 = vrot.lane.b32.xlu0 %v1170, 92
  %v1176 = vpop.permute.xlu0 %1175
  %1177 = vrot.lane.b32.xlu0 %v1174, 92
  %v1178 = vpop.permute.xlu0 %1177
  %1179 = vrot.lane.b32.xlu0 %v1171, 92
  %v1180 = vpop.permute.xlu0 %1179
  %v1181 = vsel %vm406, %v1176, %v1178
  %v1182 = vsel %vm406, %v1178, %v1180
  %1186 = vst [vmem:[#allocation3 + $0x48] sm:$0xf] %v1181
  %1187 = vst [vmem:[#allocation3 + $0x50] sm:$0xf] %v1182
  %1188 = vst.msk [vmem:[#allocation3 + $0x58] sm:$0xf] %vm290, %v1180
  %v1189 = vld [vmem:[#allocation2] sm:$0xff]
  %v1190 = vld [vmem:[#allocation2 + $0x8] sm:$0xf]
  %v1193 = vcombine.low %v1189, %v1189
  %v1194 = vcombine.low %v1190, %v1190
  %1195 = vrot.lane.b32.xlu0 %v1193, 91
  %v1196 = vpop.permute.xlu0 %1195
  %1197 = vrot.lane.b32.xlu0 %v1189, 91
  %v1198 = vpop.permute.xlu0 %1197
  %1199 = vrot.lane.b32.xlu0 %v1194, 91
  %v1200 = vpop.permute.xlu0 %1199
  %v1201 = vsel %vm427, %v1196, %v1198
  %v1202 = vsel %vm427, %v1198, %v1200
  %1206 = vst [vmem:[#allocation3 + $0x48] sm:$0xf0] %v1201
  %1207 = vst [vmem:[#allocation3 + $0x50] sm:$0xf0] %v1202
  %1208 = vst.msk [vmem:[#allocation3 + $0x58] sm:$0xf0] %vm311, %v1200
  %v1209 = vld [vmem:[#allocation2] sm:$0xff]
  %v1210 = vld [vmem:[#allocation2 + $0x8] sm:$0xf]
  %v1213 = vcombine.high %v1209, %v1209
  %1214 = vrot.lane.b32.xlu0 %v1209, 90
  %v1215 = vpop.permute.xlu0 %1214
  %1216 = vrot.lane.b32.xlu0 %v1213, 90
  %v1217 = vpop.permute.xlu0 %1216
  %1218 = vrot.lane.b32.xlu0 %v1210, 90
  %v1219 = vpop.permute.xlu0 %1218
  %v1220 = vsel %vm447, %v1215, %v1217
  %v1221 = vsel %vm447, %v1217, %v1219
  %1225 = vst [vmem:[#allocation3 + $0x60] sm:$0xf] %v1220
  %1226 = vst [vmem:[#allocation3 + $0x68] sm:$0xf] %v1221
  %1227 = vst.msk [vmem:[#allocation3 + $0x70] sm:$0xf] %vm290, %v1219
  %v1228 = vld [vmem:[%s1] sm:$0xff]
  %v1229 = vld [vmem:[%s1 + $0x8] sm:$0xff]
  %v1230 = vld [vmem:[#allocation3] sm:$0xff]
  %v1231 = vld [vmem:[#allocation3 + $0x8] sm:$0xff]
  %v1232 = vld [vmem:[#allocation3 + $0x10] sm:$0xff]
  %v1233 = vld [vmem:[#allocation3 + $0x18] sm:$0xff]
  %v1234 = vld [vmem:[#allocation3 + $0x20] sm:$0xff]
  %v1235 = vld [vmem:[#allocation3 + $0x28] sm:$0xff]
  %v1236 = vld [vmem:[#allocation3 + $0x30] sm:$0xff]
  %v1237 = vld [vmem:[#allocation3 + $0x38] sm:$0xff]
  %v1238 = vld [vmem:[#allocation3 + $0x40] sm:$0xff]
  %v1239 = vld [vmem:[#allocation3 + $0x48] sm:$0xff]
  %v1240 = vld [vmem:[#allocation3 + $0x50] sm:$0xff]
  %v1241 = vld [vmem:[#allocation3 + $0x58] sm:$0xff]
  %v1242 = vld [vmem:[#allocation3 + $0x60] sm:$0xf]
  %v1243 = vld [vmem:[#allocation3 + $0x68] sm:$0xf]
  %v1244 = vld [vmem:[#allocation3 + $0x70] sm:$0xf]
  %v1245 = vld [vmem:[%s2] sm:$0xff]
  %v1246 = vld [vmem:[%s2 + $0x8] sm:$0xff]
  %1248 = vset.pattern.permute.xlu0 0
  %1249 = vperm.xlu0 %1248, %v1245
  %v1250 = vpop.permute.xlu0 %1249
  %1253 = vset.pattern.permute.xlu0 0
  %1254 = vperm.xlu0 %1253, %v1246
  %v1255 = vpop.permute.xlu0 %1254
  %v1258 = vsel %vm485, %v1228, 0
  %v1261 = vsel %vm485, %v1229, 0
  %v1264 = vsel %vm492, %v1242, 0
  %v1267 = vsel %vm492, %v1243, 0
  %v1270 = vsel %vm492, %v1244, 0
  %1272 = vmatprep.subr.mxu0 %v1231
  %1273 = vmatpush1.msra.mxu0 %v1230
  %1274 = vmatprep.subr.mxu0 %v1234
  %1275 = vmatpush1.msra.mxu0 %v1233
  %1276 = vmatprep.subr.mxu0 %v1237
  %1277 = vmatpush1.msra.mxu0 %v1236
  %1278 = vmatprep.subr.mxu0 %v1240
  %1279 = vmatpush1.msra.mxu0 %v1239
  %1280 = vmatprep.subr.mxu0 %v1267
  %1281 = vmatpush1.msra.mxu0 %v1264
  %1282 = vmatprep.subr.mxu0 0.0
  %1283 = vmatpush1.msra.mxu0 0.0
  %1284 = vmatprep.subr.mxu0 0.0
  %1285 = vmatpush1.msra.mxu0 0.0
  %1286 = vmatprep.subr.mxu0 0.0
  %1287 = vmatpush1.msra.mxu0 0.0
  %1288 = vmatprep.subr.mxu0 0.0
  %1289 = vmatpush1.msra.mxu0 0.0
  %1290 = vmatprep.subr.mxu0 0.0
  %1291 = vmatpush1.msra.mxu0 0.0
  %1292 = vmatprep.subr.mxu0 0.0
  %1293 = vmatpush1.msra.mxu0 0.0
  %1294 = vmatprep.subr.mxu0 0.0
  %1295 = vmatpush1.msra.mxu0 0.0
  %1296 = vmatprep.subr.mxu0 0.0
  %1297 = vmatpush1.msra.mxu0 0.0
  %1298 = vmatprep.subr.mxu0 0.0
  %1299 = vmatpush1.msra.mxu0 0.0
  %1300 = vmatprep.subr.mxu0 0.0
  %1301 = vmatpush1.msra.mxu0 0.0
  %1302 = vmatprep.subr.mxu0 0.0
  %1303 = vmatpush1.msra.mxu0 0.0
  %1304 = vmatprep.subr.mxu0 0.0
  %1305 = vmatpush1.msra.mxu0 0.0
  %1306 = vmatprep.subr.mxu0 0.0
  %1307 = vmatpush1.msra.mxu0 0.0
  %1308 = vmatprep.subr.mxu0 0.0
  %1309 = vmatpush1.msra.mxu0 0.0
  %1310 = vmatprep.subr.mxu0 0.0
  %1311 = vmatpush1.msra.mxu0 0.0
  %1312 = vmatprep.subr.mxu0 0.0
  %1313 = vmatpush1.msra.mxu0 0.0
  %1314 = vmatprep.subr.mxu0 0.0
  %1315 = vmatpush1.msra.mxu0 0.0
  %1316 = vmatprep.subr.mxu0 0.0
  %1317 = vmatpush1.msra.mxu0 0.0
  %1318 = vmatprep.subr.mxu0 0.0
  %1319 = vmatpush1.msra.mxu0 0.0
  %1320 = vmatprep.subr.mxu0 0.0
  %1321 = vmatpush1.msra.mxu0 0.0
  %1322 = vmatprep.subr.mxu0 0.0
  %1323 = vmatpush1.msra.mxu0 0.0
  %1324 = vmatprep.subr.mxu0 0.0
  %1325 = vmatpush1.msra.mxu0 0.0
  %1326 = vmatprep.subr.mxu0 0.0
  %1327 = vmatpush1.msra.mxu0 0.0
  %1328 = vmatprep.subr.mxu0 0.0
  %1329 = vmatpush1.msra.mxu0 0.0
  %1330 = vmatprep.subr.mxu0 0.0
  %1331 = vmatpush1.msra.mxu0 0.0
  %1332 = vmatprep.subr.mxu0 0.0
  %1333 = vmatpush1.msra.mxu0 0.0
  %1334 = vmatprep.subr.mxu0 0.0
  %1335 = vmatpush1.msra.mxu0 0.0
  %1336 = vmatprep.mubr.f32.mxu0 0.0
  %1337 = vmatmul.mubr.f32.gmra.mrb[0].mxu0 %v1258
  %v1338 = vpop.f32.mrb[0].mxu0
  %v1339 = vadd.f32 %v1250, %v1338
  %v1340 = vpop.f32.mrb[0].mxu0
  %v1341 = vadd.f32 %v1250, %v1340
  %1342 = vmatprep.mubr.f32.mxu0 0.0
  %1343 = vmatmul.mubr.f32.gmra.mrb[0].mxu0 %v1261
  %v1344 = vpop.f32.mrb[0].mxu0
  %v1345 = vadd.f32 %v1255, %v1344
  %v1346 = vpop.f32.mrb[0].mxu0
  %v1347 = vadd.f32 %v1255, %v1346
  %1348 = vdwg.mxu0
  %1349 = vmatprep.subr.mxu0 0.0
  %1350 = vmatpush1.msra.mxu0 %v1232
  %1351 = vmatprep.subr.mxu0 0.0
  %1352 = vmatpush1.msra.mxu0 %v1235
  %1353 = vmatprep.subr.mxu0 0.0
  %1354 = vmatpush1.msra.mxu0 %v1238
  %1355 = vmatprep.subr.mxu0 0.0
  %1356 = vmatpush1.msra.mxu0 %v1241
  %1357 = vmatprep.subr.mxu0 0.0
  %1358 = vmatpush1.msra.mxu0 %v1270
  %1359 = vmatprep.subr.mxu0 0.0
  %1360 = vmatpush1.msra.mxu0 0.0
  %1361 = vmatprep.subr.mxu0 0.0
  %1362 = vmatpush1.msra.mxu0 0.0
  %1363 = vmatprep.subr.mxu0 0.0
  %1364 = vmatpush1.msra.mxu0 0.0
  %1365 = vmatprep.subr.mxu0 0.0
  %1366 = vmatpush1.msra.mxu0 0.0
  %1367 = vmatprep.subr.mxu0 0.0
  %1368 = vmatpush1.msra.mxu0 0.0
  %1369 = vmatprep.subr.mxu0 0.0
  %1370 = vmatpush1.msra.mxu0 0.0
  %1371 = vmatprep.subr.mxu0 0.0
  %1372 = vmatpush1.msra.mxu0 0.0
  %1373 = vmatprep.subr.mxu0 0.0
  %1374 = vmatpush1.msra.mxu0 0.0
  %1375 = vmatprep.subr.mxu0 0.0
  %1376 = vmatpush1.msra.mxu0 0.0
  %1377 = vmatprep.subr.mxu0 0.0
  %1378 = vmatpush1.msra.mxu0 0.0
  %1379 = vmatprep.subr.mxu0 0.0
  %1380 = vmatpush1.msra.mxu0 0.0
  %1381 = vmatprep.subr.mxu0 0.0
  %1382 = vmatpush1.msra.mxu0 0.0
  %1383 = vmatprep.subr.mxu0 0.0
  %1384 = vmatpush1.msra.mxu0 0.0
  %1385 = vmatprep.subr.mxu0 0.0
  %1386 = vmatpush1.msra.mxu0 0.0
  %1387 = vmatprep.subr.mxu0 0.0
  %1388 = vmatpush1.msra.mxu0 0.0
  %1389 = vmatprep.subr.mxu0 0.0
  %1390 = vmatpush1.msra.mxu0 0.0
  %1391 = vmatprep.subr.mxu0 0.0
  %1392 = vmatpush1.msra.mxu0 0.0
  %1393 = vmatprep.subr.mxu0 0.0
  %1394 = vmatpush1.msra.mxu0 0.0
  %1395 = vmatprep.subr.mxu0 0.0
  %1396 = vmatpush1.msra.mxu0 0.0
  %1397 = vmatprep.subr.mxu0 0.0
  %1398 = vmatpush1.msra.mxu0 0.0
  %1399 = vmatprep.subr.mxu0 0.0
  %1400 = vmatpush1.msra.mxu0 0.0
  %1401 = vmatprep.subr.mxu0 0.0
  %1402 = vmatpush1.msra.mxu0 0.0
  %1403 = vmatprep.subr.mxu0 0.0
  %1404 = vmatpush1.msra.mxu0 0.0
  %1405 = vmatprep.subr.mxu0 0.0
  %1406 = vmatpush1.msra.mxu0 0.0
  %1407 = vmatprep.subr.mxu0 0.0
  %1408 = vmatpush1.msra.mxu0 0.0
  %1409 = vmatprep.subr.mxu0 0.0
  %1410 = vmatpush1.msra.mxu0 0.0
  %1411 = vmatprep.subr.mxu0 0.0
  %1412 = vmatpush1.msra.mxu0 0.0
  %1413 = vmatprep.mubr.f32.mxu0 0.0
  %1414 = vmatmul.mubr.f32.gmra.mrb[0].mxu0 %v1258
  %v1415 = vpop.f32.mrb[0].mxu0
  %v1416 = vadd.f32 %v1250, %v1415
  %v1417 = vpop.f32.mrb[0].mxu0
  %1418 = vmatprep.mubr.f32.mxu0 0.0
  %1419 = vmatmul.mubr.f32.gmra.mrb[0].mxu0 %v1261
  %v1420 = vpop.f32.mrb[0].mxu0
  %v1421 = vadd.f32 %v1255, %v1420
  %v1422 = vpop.f32.mrb[0].mxu0
  %1423 = vdwg.mxu0
  %v1424 = vld [vmem:[%s3] sm:$0x7]
  %v1426 = vlaneseq
  %v1427 = vshrl.u32 %v1426, 7
  %v1428 = vsub.s32 0, %v1427
  %v1429 = vrot.slane %v1424, %v1428
  %v1430 = vlaneseq
  %v1431 = vshrl.u32 %v1430, 7
  %v1432 = vsub.s32 1, %v1431
  %v1433 = vrot.slane %v1424, %v1432
  %v1434 = vlaneseq
  %v1435 = vshrl.u32 %v1434, 7
  %v1436 = vsub.s32 2, %v1435
  %v1437 = vrot.slane %v1424, %v1436
  %v1441 = vmul.f32 %v1339, %v1429
  %v1442 = vmul.f32 %v1341, %v1433
  %v1443 = vmul.f32 %v1416, %v1437
  %v1444 = vmul.f32 %v1345, %v1429
  %v1445 = vmul.f32 %v1347, %v1433
  %v1446 = vmul.f32 %v1421, %v1437
  %s1447 = scalar_lea.vmem %s4, 32
  %1448 = vst.msk [vmem:[%s1447] sm:$0xff] %vm677, %v1441
  %1449 = vst.msk [vmem:[%s1447 + $0x10] sm:$0xff] %vm677, %v1444
  %1452 = vrot.lane.b32.xlu0 %v1441, 126
  %v1453 = vpop.permute.xlu0 %1452
  %1454 = vrot.lane.b32.xlu0 %v1444, 126
  %v1455 = vpop.permute.xlu0 %1454
  %1458 = vst.msk [vmem:[%s1447] sm:$0xff] %vm688, %v1453
  %1459 = vst.msk [vmem:[%s1447 + $0x10] sm:$0xff] %vm688, %v1455
  %1460 = vrot.lane.b32.xlu0 %v1441, 124
  %v1461 = vpop.permute.xlu0 %1460
  %1462 = vrot.lane.b32.xlu0 %v1444, 124
  %v1463 = vpop.permute.xlu0 %1462
  %1466 = vst.msk [vmem:[%s1447] sm:$0xff] %vm697, %v1461
  %1467 = vst.msk [vmem:[%s1447 + $0x10] sm:$0xff] %vm697, %v1463
  %1468 = vrot.lane.b32.xlu0 %v1441, 122
  %v1469 = vpop.permute.xlu0 %1468
  %1470 = vrot.lane.b32.xlu0 %v1444, 122
  %v1471 = vpop.permute.xlu0 %1470
  %1474 = vst.msk [vmem:[%s1447] sm:$0xff] %vm706, %v1469
  %1475 = vst.msk [vmem:[%s1447 + $0x10] sm:$0xff] %vm706, %v1471
  %1476 = vrot.lane.b32.xlu0 %v1441, 120
  %v1477 = vpop.permute.xlu0 %1476
  %1478 = vrot.lane.b32.xlu0 %v1444, 120
  %v1479 = vpop.permute.xlu0 %1478
  %1482 = vst.msk [vmem:[%s1447] sm:$0xff] %vm715, %v1477
  %1483 = vst.msk [vmem:[%s1447 + $0x10] sm:$0xff] %vm715, %v1479
  %1484 = vrot.lane.b32.xlu0 %v1441, 118
  %v1485 = vpop.permute.xlu0 %1484
  %1486 = vrot.lane.b32.xlu0 %v1444, 118
  %v1487 = vpop.permute.xlu0 %1486
  %1490 = vst.msk [vmem:[%s1447] sm:$0xff] %vm724, %v1485
  %1491 = vst.msk [vmem:[%s1447 + $0x10] sm:$0xff] %vm724, %v1487
  %1492 = vrot.lane.b32.xlu0 %v1441, 116
  %v1493 = vpop.permute.xlu0 %1492
  %1494 = vrot.lane.b32.xlu0 %v1444, 116
  %v1495 = vpop.permute.xlu0 %1494
  %1498 = vst.msk [vmem:[%s1447] sm:$0xff] %vm733, %v1493
  %1499 = vst.msk [vmem:[%s1447 + $0x10] sm:$0xff] %vm733, %v1495
  %1502 = vrot.lane.b32.xlu0 %v1441, 114
  %v1503 = vpop.permute.xlu0 %1502
  %1504 = vrot.lane.b32.xlu0 %v1442, 114
  %v1505 = vpop.permute.xlu0 %1504
  %1506 = vrot.lane.b32.xlu0 %v1444, 114
  %v1507 = vpop.permute.xlu0 %1506
  %1508 = vrot.lane.b32.xlu0 %v1445, 114
  %v1509 = vpop.permute.xlu0 %1508
  %v1510 = vsel %vm746, %v1503, %v1505
  %v1511 = vsel %vm746, %v1507, %v1509
  %1514 = vst.msk [vmem:[%s1447] sm:$0xff] %vm751, %v1510
  %1515 = vst.msk [vmem:[%s1447 + $0x10] sm:$0xff] %vm751, %v1511
  %1516 = vrot.lane.b32.xlu0 %v1442, 112
  %v1517 = vpop.permute.xlu0 %1516
  %1518 = vrot.lane.b32.xlu0 %v1445, 112
  %v1519 = vpop.permute.xlu0 %1518
  %1522 = vst.msk [vmem:[%s1447 + $0x8] sm:$0xff] %vm677, %v1517
  %1523 = vst.msk [vmem:[%s1447 + $0x18] sm:$0xff] %vm677, %v1519
  %1524 = vrot.lane.b32.xlu0 %v1442, 110
  %v1525 = vpop.permute.xlu0 %1524
  %1526 = vrot.lane.b32.xlu0 %v1445, 110
  %v1527 = vpop.permute.xlu0 %1526
  %1530 = vst.msk [vmem:[%s1447 + $0x8] sm:$0xff] %vm688, %v1525
  %1531 = vst.msk [vmem:[%s1447 + $0x18] sm:$0xff] %vm688, %v1527
  %1532 = vrot.lane.b32.xlu0 %v1442, 108
  %v1533 = vpop.permute.xlu0 %1532
  %1534 = vrot.lane.b32.xlu0 %v1445, 108
  %v1535 = vpop.permute.xlu0 %1534
  %1538 = vst.msk [vmem:[%s1447 + $0x8] sm:$0xff] %vm697, %v1533
  %1539 = vst.msk [vmem:[%s1447 + $0x18] sm:$0xff] %vm697, %v1535
  %1540 = vrot.lane.b32.xlu0 %v1442, 106
  %v1541 = vpop.permute.xlu0 %1540
  %1542 = vrot.lane.b32.xlu0 %v1445, 106
  %v1543 = vpop.permute.xlu0 %1542
  %1546 = vst.msk [vmem:[%s1447 + $0x8] sm:$0xff] %vm706, %v1541
  %1547 = vst.msk [vmem:[%s1447 + $0x18] sm:$0xff] %vm706, %v1543
  %1548 = vrot.lane.b32.xlu0 %v1442, 104
  %v1549 = vpop.permute.xlu0 %1548
  %1550 = vrot.lane.b32.xlu0 %v1445, 104
  %v1551 = vpop.permute.xlu0 %1550
  %1554 = vst.msk [vmem:[%s1447 + $0x8] sm:$0xff] %vm715, %v1549
  %1555 = vst.msk [vmem:[%s1447 + $0x18] sm:$0xff] %vm715, %v1551
  %1556 = vrot.lane.b32.xlu0 %v1442, 102
  %v1557 = vpop.permute.xlu0 %1556
  %1558 = vrot.lane.b32.xlu0 %v1445, 102
  %v1559 = vpop.permute.xlu0 %1558
  %1562 = vst.msk [vmem:[%s1447 + $0x8] sm:$0xff] %vm724, %v1557
  %1563 = vst.msk [vmem:[%s1447 + $0x18] sm:$0xff] %vm724, %v1559
  %1566 = vrot.lane.b32.xlu0 %v1442, 100
  %v1567 = vpop.permute.xlu0 %1566
  %1568 = vrot.lane.b32.xlu0 %v1443, 100
  %v1569 = vpop.permute.xlu0 %1568
  %1570 = vrot.lane.b32.xlu0 %v1445, 100
  %v1571 = vpop.permute.xlu0 %1570
  %1572 = vrot.lane.b32.xlu0 %v1446, 100
  %v1573 = vpop.permute.xlu0 %1572
  %v1574 = vsel %vm812, %v1567, %v1569
  %v1575 = vsel %vm812, %v1571, %v1573
  %1578 = vst.msk [vmem:[%s1447 + $0x8] sm:$0xff] %vm733, %v1574
  %1579 = vst.msk [vmem:[%s1447 + $0x18] sm:$0xff] %vm733, %v1575
  %1580 = vrot.lane.b32.xlu0 %v1443, 98
  %v1581 = vpop.permute.xlu0 %1580
  %1582 = vrot.lane.b32.xlu0 %v1446, 98
  %v1583 = vpop.permute.xlu0 %1582
  %1586 = vst.msk [vmem:[%s1447 + $0x8] sm:$0xff] %vm751, %v1581
  %1587 = vst.msk [vmem:[%s1447 + $0x18] sm:$0xff] %vm751, %v1583
  // Predicated region
  $region18: #{_scaling_conv_adapter_impl.1} parent=0 // pred_check
    _
  $region19: #{_scaling_conv_adapter_impl.1} parent=0 // pred_check_branch
    %1589 = sbr.rel (0) target = $region21
  $region20: #{_scaling_conv_adapter_impl.1} parent=0 // pred_region
    _
  $region21: #{_scaling_conv_adapter_impl.1} parent=0 // pred_fallthru
    _
  // Predicated region
  $region22: #{_scaling_conv_adapter_impl.1} parent=0 // pred_check
    _
  $region23: #{_scaling_conv_adapter_impl.1} parent=0 // pred_check_branch
    %1591 = sbr.rel (0) target = $region25
  $region24: #{_scaling_conv_adapter_impl.1} parent=0 // pred_region
    _
  $region25: #{_scaling_conv_adapter_impl.1} parent=0 // pred_fallthru
    _

</llo_original>
